<compile_context>
chip_gen: v6e
topology: v6e:2x2x1
jax: 0.10.0
libtpu: 0.0.40
codegen_flags: <defaults>
</compile_context>

<pallas_src>
import jax
import jax.numpy as jnp
from jax.experimental import pallas as pl
from jax.experimental.pallas import tpu as pltpu

LANE = 128      # TPU lane width (last dim)
SUBLANE = 8     # TPU sublane width (second-to-last dim)


def _round_up(x, m):
    return ((x + m - 1) // m) * m


def _largest_aligned_divisor(n, max_tile, align=SUBLANE):
    """Largest multiple of `align` that divides `n` and is <= max_tile."""
    best = align
    d = align
    while d <= min(n, max_tile):
        if n % d == 0:
            best = d
        d += align
    return best


# ---------------------------- Pallas kernel ----------------------------

def _res_head_kernel(x_ref, w_ref, b_ref, o_ref, acc_ref):
    # x_ref  : [TB, Ck, HW]  NCHW-native activation tile (spatial flattened, C tiled)
    # w_ref  : [Ck, NCp]     f32 FC weight slice, 1/(H*W) pool scale pre-folded
    # b_ref  : [1, NCp]      f32 FC bias (zero-padded to a 128-lane multiple)
    # o_ref  : [TB, NCp]     lane-dense f32 logits tile
    # acc_ref: [TB, NCp]     f32 accumulator, resident across the channel axis
    k = pl.program_id(1)

    @pl.when(k == 0)
    def _():
        acc_ref[...] = jnp.zeros_like(acc_ref)

    # Average pool == sum over the spatial axis (scale folded into w).
    # Accumulate in f32 even when the activation is bf16.
    pooled = jnp.sum(x_ref[...].astype(jnp.float32), axis=-1)       # [TB, Ck]
    acc_ref[...] += jnp.dot(pooled, w_ref[...],
                            preferred_element_type=jnp.float32)

    @pl.when(k == pl.num_programs(1) - 1)
    def _():
        o_ref[...] = (acc_ref[...] + b_ref[...]).astype(o_ref.dtype)


# ---------------------------- wrapper ----------------------------

def res_head(x_nchw, w_fc, b_fc, *, vmem_budget_bytes=12 * 1024 * 1024):
    """ResHead forward: AdaptiveAvgPool2d((1,1)) + flatten + Linear.

    x_nchw : [N, C, H, W] (PyTorch layout; f32 or bf16)
    w_fc   : [C, num_classes]   (transposed torch Linear weight)
    b_fc   : [num_classes]
    returns: [N, num_classes] float32 logits
    """
    N, C, H, W = x_nchw.shape
    num_classes = w_fc.shape[1]
    HW = H * W

    # NCHW-native: free reshape only — no transpose, no HBM-copy of the activation.
    x3 = x_nchw.reshape(N, C, HW)

    # Channel tiling: Ck divides the (8-aligned) channel count, so boundary
    # blocks never expose uninitialised channel lanes to the contraction.
    Cp = _round_up(C, SUBLANE)
    Ck = _largest_aligned_divisor(Cp, 256)
    if Cp != C:
        # Rare (C % 8 != 0): explicit zero-pad keeps padded channel lanes zero
        # so 0-weight * stale-VMEM garbage can never produce NaN.
        x3 = jnp.pad(x3, ((0, 0), (0, Cp - C), (0, 0)))

    # Classes padded to a dense 128-lane multiple (weight/bias only; tiny).
    NCp = _round_up(num_classes, LANE)
    w_p = jnp.pad(w_fc.astype(jnp.float32) * (1.0 / HW),
                  ((0, Cp - C), (0, NCp - num_classes)))
    b_p = jnp.pad(b_fc.astype(jnp.float32), (0, NCp - num_classes)).reshape(1, NCp)

    # Batch tile from a conservative VMEM budget (fits the v5e 16 MiB scoped
    # default; well under v6e 32 MiB scoped and v7x 64 MiB physical).
    x_item = jnp.dtype(x3.dtype).itemsize
    hw_lanes = _round_up(HW, LANE)                       # VMEM lane padding of spatial axis
    fixed_bytes = 2 * Ck * NCp * 4 + 2 * NCp * 4         # w + b, double-buffered (f32)
    per_row_bytes = (2 * Ck * hw_lanes * x_item          # x block, double-buffered
                     + NCp * 4                           # f32 accumulator row
                     + 2 * NCp * 4)                      # f32 output block, double-buffered
    tb = max(1, (vmem_budget_bytes - fixed_bytes) // per_row_bytes)
    TB = max(SUBLANE, min(128, (tb // SUBLANE) * SUBLANE))
    TB = min(TB, _round_up(N, SUBLANE))

    grid = (pl.cdiv(N, TB), Cp // Ck)                    # batch tail via partial blocks

    out = pl.pallas_call(
        _res_head_kernel,
        out_shape=jax.ShapeDtypeStruct((N, NCp), jnp.float32),
        grid=grid,
        in_specs=[
            pl.BlockSpec((TB, Ck, HW), lambda i, k: (i, k, 0)),
            pl.BlockSpec((Ck, NCp), lambda i, k: (k, 0)),
            pl.BlockSpec((1, NCp), lambda i, k: (0, 0)),
        ],
        out_specs=pl.BlockSpec((TB, NCp), lambda i, k: (i, 0)),
        scratch_shapes=[pltpu.VMEM((TB, NCp), jnp.float32)],
        compiler_params=pltpu.CompilerParams(
            dimension_semantics=("parallel", "arbitrary")),
    )(x3, w_p, b_p)

    return out[:, :num_classes]


# ---------------------------- demo / self-check ----------------------------

if __name__ == "__main__":
    key = jax.random.PRNGKey(0)
    kx, kw, kb = jax.random.split(key, 3)

    # --- f32 path, small but multi-step grid (forced tiny VMEM budget) ---
    # ResHead(dim_in=384, num_classes=10) on a [N=10, C=384, H=7, W=7] feature map.
    N, C, H, W = 10, 384, 7, 7
    num_classes = 10

    x = jax.random.normal(kx, (N, C, H, W), jnp.float32)
    w_fc = 0.01 * jax.random.normal(kw, (C, num_classes), jnp.float32)
    b_fc = 0.01 * jax.random.normal(kb, (num_classes,), jnp.float32)

    fn_small_vmem = jax.jit(lambda a, b, c: res_head(a, b, c, vmem_budget_bytes=1 << 20))
    logits = fn_small_vmem(x, w_fc, b_fc)
    jax.block_until_ready(logits)

    ref = x.mean(axis=(2, 3)) @ w_fc + b_fc
    assert logits.shape == (N, num_classes), logits.shape
    assert bool(jnp.all(jnp.isfinite(logits)))
    assert bool(jnp.allclose(logits, ref, atol=1e-4, rtol=1e-3))

    # --- bf16 activation path (default VMEM budget), f32 accumulation ---
    N2, C2, H2, W2 = 2, 64, 8, 8
    x2 = jax.random.normal(jax.random.PRNGKey(1), (N2, C2, H2, W2), jnp.float32)
    w2 = 0.01 * jax.random.normal(jax.random.PRNGKey(2), (C2, num_classes), jnp.float32)
    b2 = 0.01 * jax.random.normal(jax.random.PRNGKey(3), (num_classes,), jnp.float32)

    x2_bf16 = x2.astype(jnp.bfloat16)
    logits_bf16 = jax.jit(res_head)(x2_bf16, w2, b2)
    jax.block_until_ready(logits_bf16)

    ref_bf16 = x2_bf16.astype(jnp.float32).mean(axis=(2, 3)) @ w2 + b2
    assert logits_bf16.shape == (N2, num_classes)
    assert bool(jnp.all(jnp.isfinite(logits_bf16)))
    assert bool(jnp.allclose(logits_bf16, ref_bf16, atol=1e-3, rtol=1e-2))

    print("KERNEL_OK")
</pallas_src>

<mosaic_0001>
module attributes {stable_mosaic.version = 11 : i64} {
  func.func @_res_head_kernel(%arg0: i32, %arg1: i32, %arg2: memref<8x192x49xf32, #tpu.memory_space<vmem>>, %arg3: memref<192x128xf32, #tpu.memory_space<vmem>>, %arg4: memref<1x128xf32, #tpu.memory_space<vmem>>, %arg5: memref<8x128xf32, #tpu.memory_space<vmem>>, %arg6: memref<8x128xf32, #tpu.memory_space<vmem>>) attributes {dimension_semantics = [#tpu.dimension_semantics<parallel>, #tpu.dimension_semantics<arbitrary>], iteration_bounds = array<i64: 2, 2>, scalar_prefetch = 0 : i64, scratch_operands = 1 : i64, tpu.core_type = #tpu.core_type<tc>, window_params = [{transform_indices = @transform_0, window_bounds = array<i64: 8, 192, 49>}, {transform_indices = @transform_1, window_bounds = array<i64: 192, 128>}, {pipeline_mode = #tpu.pipeline_mode<synchronous>, transform_indices = @transform_2, window_bounds = array<i64: 1, 128>}, {transform_indices = @transform_3, window_bounds = array<i64: 8, 128>}]} {
    %c0_i32 = arith.constant 0 : i32
    %0 = arith.cmpi eq, %arg1, %c0_i32 : i32
    %1 = arith.extui %0 : i1 to i32
    %c0_i32_0 = arith.constant 0 : i32
    %2 = arith.cmpi ne, %1, %c0_i32_0 : i32
    scf.if %2 {
      %cst_11 = arith.constant 0.000000e+00 : f32
      %13 = vector.broadcast %cst_11 : f32 to vector<8x128xf32>
      %c0_12 = arith.constant 0 : index
      %c0_13 = arith.constant 0 : index
      %14 = vector.load %arg6[%c0_12, %c0_13] : memref<8x128xf32, #tpu.memory_space<vmem>>, vector<8x128xf32>
      tpu.vector_store %arg6[%c0_12, %c0_13], %13 {strides = array<i32>} : memref<8x128xf32, #tpu.memory_space<vmem>>, vector<8x128xf32>,
    } else {
    }
    %c0 = arith.constant 0 : index
    %c0_1 = arith.constant 0 : index
    %c0_2 = arith.constant 0 : index
    %3 = vector.load %arg2[%c0, %c0_1, %c0_2] : memref<8x192x49xf32, #tpu.memory_space<vmem>>, vector<8x192x49xf32>
    %cst = arith.constant dense<0.000000e+00> : vector<8x192xf32>
    %4 = vector.multi_reduction <add>, %3, %cst [2] : vector<8x192x49xf32> to vector<8x192xf32>
    %c0_3 = arith.constant 0 : index
    %c0_4 = arith.constant 0 : index
    %5 = vector.load %arg6[%c0_3, %c0_4] : memref<8x128xf32, #tpu.memory_space<vmem>>, vector<8x128xf32>
    %c0_5 = arith.constant 0 : index
    %c0_6 = arith.constant 0 : index
    %6 = vector.load %arg3[%c0_5, %c0_6] : memref<192x128xf32, #tpu.memory_space<vmem>>, vector<192x128xf32>
    %cst_7 = arith.constant dense<0.000000e+00> : vector<8x128xf32>
    %7 = tpu.matmul %4, %6, %cst_7 {dimension_numbers = #tpu.dot_dimension_numbers<[1], [0], [0], [1], [0, 0, 1, 1], [], []>} : vector<8x192xf32>, vector<192x128xf32>, vector<8x128xf32> -> vector<8x128xf32>
    %8 = arith.addf %5, %7 : vector<8x128xf32>
    %c0_8 = arith.constant 0 : index
    %c0_9 = arith.constant 0 : index
    %9 = vector.load %arg6[%c0_8, %c0_9] : memref<8x128xf32, #tpu.memory_space<vmem>>, vector<8x128xf32>
    tpu.vector_store %arg6[%c0_8, %c0_9], %8 {strides = array<i32>} : memref<8x128xf32, #tpu.memory_space<vmem>>, vector<8x128xf32>,
    %c1_i32 = arith.constant 1 : i32
    %10 = arith.cmpi eq, %arg1, %c1_i32 : i32
    %11 = arith.extui %10 : i1 to i32
    %c0_i32_10 = arith.constant 0 : i32
    %12 = arith.cmpi ne, %11, %c0_i32_10 : i32
    scf.if %12 {
      %c0_11 = arith.constant 0 : index
      %c0_12 = arith.constant 0 : index
      %13 = vector.load %arg6[%c0_11, %c0_12] : memref<8x128xf32, #tpu.memory_space<vmem>>, vector<8x128xf32>
      %c0_13 = arith.constant 0 : index
      %c0_14 = arith.constant 0 : index
      %14 = vector.load %arg4[%c0_13, %c0_14] : memref<1x128xf32, #tpu.memory_space<vmem>>, vector<1x128xf32>
      %15 = vector.broadcast %14 : vector<1x128xf32> to vector<8x128xf32>
      %16 = arith.addf %13, %15 : vector<8x128xf32>
      %c0_15 = arith.constant 0 : index
      %c0_16 = arith.constant 0 : index
      %17 = vector.load %arg5[%c0_15, %c0_16] : memref<8x128xf32, #tpu.memory_space<vmem>>, vector<8x128xf32>
      tpu.vector_store %arg5[%c0_15, %c0_16], %16 {strides = array<i32>} : memref<8x128xf32, #tpu.memory_space<vmem>>, vector<8x128xf32>,
    } else {
    }
    return
  }
  func.func @transform_0(%arg0: i32, %arg1: i32) -> (i32, i32, i32) {
    %c0_i32 = arith.constant 0 : i32
    %c0_i32_0 = arith.constant 0 : i32
    return %arg0, %arg1, %c0_i32 : i32, i32, i32
  }
  func.func @transform_1(%arg0: i32, %arg1: i32) -> (i32, i32) {
    %c0_i32 = arith.constant 0 : i32
    %c0_i32_0 = arith.constant 0 : i32
    return %arg1, %c0_i32 : i32, i32
  }
  func.func @transform_2(%arg0: i32, %arg1: i32) -> (i32, i32) {
    %c0_i32 = arith.constant 0 : i32
    %c0_i32_0 = arith.constant 0 : i32
    %c0_i32_1 = arith.constant 0 : i32
    return %c0_i32, %c0_i32_0 : i32, i32
  }
  func.func @transform_3(%arg0: i32, %arg1: i32) -> (i32, i32) {
    %c0_i32 = arith.constant 0 : i32
    %c0_i32_0 = arith.constant 0 : i32
    return %arg0, %c0_i32 : i32, i32
  }
}

</mosaic_0001>

<llo_original>
// kernel: _lambda_.1
$region0: #{_lambda_.1}
  #allocation0 [shape = 'u32[]', space=smem, size = 0x4, offset = 0x4, fixed_abs, tag = 'smem constant byte address 0x4 - core index']
  #allocation1 [shape = 'u32[144,128]{1,0:T(1,128)}', space=vmem, size = 0x12000, scoped, tag = 'internal scratch']
  #allocation2 [shape = 'f32[8,128]{1,0:T(8,128)}', space=vmem, size = 0x1000, scoped, tag = 'scratch operand']
  %s0 = inlined_call_operand.vmem [shape: f32[10,384,49], index: 0, kind: input, shape index: {}]
  %s1 = inlined_call_operand.vmem [shape: f32[384,128], index: 1, kind: input, shape index: {}]
  %s2 = inlined_call_operand.vmem [shape: f32[1,128], index: 2, kind: input, shape index: {}]
  %s3 = inlined_call_operand.hbm [shape: f32[10,128], index: 3, kind: output, shape index: {}]
  %s4 = sld [smem:[#allocation0]]
  $region105: #{_lambda_.1} parent=0
    _
  %s6 = ssub.s32 1, %s4
  %s7 = scalar_select 0, %s6, %s4
  $region1: #{_lambda_.1} parent=0
    #allocation3 [shape = 'u8[1572864]{0}', space=vmem, size = 0x180000, scoped, tag = 'input window, operand 0']
    #allocation4 [shape = 'u8[8192]{0}', space=vmem, size = 0x2000, scoped, tag = 'output window, operand 0']
    #allocation5 [shape = 's32[2]{0}', space=sflag, size = 0x8, scoped, tag = 'scoped memory for _lambda_.1']
    %8 = vsyncpa [#allocation5], 0
    %s9 = scalar_lea.sflag [#allocation5], 1
    %10 = vsyncpa %s9, 0
    loop: start=0, step=1, limit=6
    $region2: #{_lambda_.1} parent=1 // loop_pre_header
      _
    $region3: #{_lambda_.1} parent=1 // loop_header
      %s12 = sphi 0, %s16
      %p13 = scmp.ge.s32.totalorder %s12, 6
      %s19 = sphi 0, %s31
      %s20 = sphi 0, %s27
      %s21 = sphi 0, %s19
      %s22 = sphi 0, %s20
      %s23 = sphi 0, %s21
      %s24 = sphi 0, %s22
      %s36 = sphi 0, %s38
      %s39 = sphi 0, %s36
      %s40 = sphi 0, %s39
      %s56 = sphi 0, %s40
      %s62 = sphi 0, %s64
      %s65 = sphi 0, %s62
      %s66 = sphi 0, %s65
      %s82 = sphi 0, %s66
      %s86 = sphi 0, %s86
      %s88 = sphi 0, %s86
      %s89 = sphi 0, %s88
      %s103 = sphi 0, %s89
      %s109 = sphi 0, %s111
      %s112 = sphi 0, %s109
      %s113 = sphi 0, %s112
      %s129 = sphi 0, %s113
    $region4: #{_lambda_.1} parent=1 // loop_header_branch
      %15 = sbr.rel (%p13) target = $region8
    $region5: #{_lambda_.1} parent=1 // loop_body
      %s17 = ssub.s32 %s12, 1
      %s18 = ssub.s32 %s12, 2
      %s25 = sadd.s32 1, %s20
      %p26 = scmp.ge.s32.totalorder %s25, 2
      %s27 = scalar_select %p26, 0, %s25
      %s28 = sadd.s32 1, %s19
      %s29 = scalar_select %p26, %s28, %s19
      %p30 = scmp.ge.s32.totalorder %s29, 2
      %s31 = scalar_select %p30, 0, %s29
      %s32 = ssub.s32 %s19, %s31
      %s33 = ssub.s32 %s20, %s27
      %s34 = sor.u32 %s32, %s33
      %p35 = scmp.eq.s32.totalorder %s34, 0
      %s37 = sadd.s32 %s36, 1
      %s38 = scalar_select %p35, %s36, %s37
      %p41 = pneg %p35
      %p42 = scmp.eq.s32.totalorder %s12, 3
      %p43 = por %p41, %p42
      %p44 = scmp.ne.s32.totalorder %s36, %s39
      %p45 = scmp.eq.s32.totalorder %s12, 0
      %p46 = por %p44, %p45
      %p47 = scmp.ne.s32.totalorder %s36, %s39
      %p48 = scmp.eq.s32.totalorder %s17, 3
      %p49 = por %p47, %p48
      %p50 = scmp.ne.s32.totalorder %s39, %s40
      %p51 = scmp.eq.s32.totalorder %s17, 0
      %p52 = por %p50, %p51
      %p53 = scmp.ne.s32.totalorder %s39, %s40
      %p54 = scmp.eq.s32.totalorder %s18, 3
      %p55 = por %p53, %p54
      %p57 = scmp.ne.s32.totalorder %s40, %s56
      %p58 = scmp.eq.s32.totalorder %s18, 0
      %p59 = por %p57, %p58
      %s60 = ssub.s32 %s20, %s27
      %p61 = scmp.eq.s32.totalorder %s60, 0
      %s63 = sadd.s32 %s62, 1
      %s64 = scalar_select %p61, %s62, %s63
      %p67 = pneg %p61
      %p68 = scmp.eq.s32.totalorder %s12, 3
      %p69 = por %p67, %p68
      %p70 = scmp.ne.s32.totalorder %s62, %s65
      %p71 = scmp.eq.s32.totalorder %s12, 0
      %p72 = por %p70, %p71
      %p73 = scmp.ne.s32.totalorder %s62, %s65
      %p74 = scmp.eq.s32.totalorder %s17, 3
      %p75 = por %p73, %p74
      %p76 = scmp.ne.s32.totalorder %s65, %s66
      %p77 = scmp.eq.s32.totalorder %s17, 0
      %p78 = por %p76, %p77
      %p79 = scmp.ne.s32.totalorder %s65, %s66
      %p80 = scmp.eq.s32.totalorder %s18, 3
      %p81 = por %p79, %p80
      %p83 = scmp.ne.s32.totalorder %s66, %s82
      %p84 = scmp.eq.s32.totalorder %s18, 0
      %p85 = por %p83, %p84
      %s87 = sadd.s32 %s86, 1
      %p90 = scmp.eq.s32.totalorder %s12, 3
      %p91 = scmp.ne.s32.totalorder %s86, %s88
      %p92 = scmp.eq.s32.totalorder %s12, 0
      %p93 = por %p91, %p92
      %p94 = scmp.ne.s32.totalorder %s86, %s88
      %p95 = scmp.eq.s32.totalorder %s17, 3
      %p96 = por %p94, %p95
      %p97 = scmp.ne.s32.totalorder %s88, %s89
      %p98 = scmp.eq.s32.totalorder %s17, 0
      %p99 = por %p97, %p98
      %p100 = scmp.ne.s32.totalorder %s88, %s89
      %p101 = scmp.eq.s32.totalorder %s18, 3
      %p102 = por %p100, %p101
      %p104 = scmp.ne.s32.totalorder %s89, %s103
      %p105 = scmp.eq.s32.totalorder %s18, 0
      %p106 = por %p104, %p105
      %s107 = ssub.s32 %s19, %s31
      %p108 = scmp.eq.s32.totalorder %s107, 0
      %s110 = sadd.s32 %s109, 1
      %s111 = scalar_select %p108, %s109, %s110
      %p114 = pneg %p108
      %p115 = scmp.eq.s32.totalorder %s12, 3
      %p116 = por %p114, %p115
      %p117 = scmp.ne.s32.totalorder %s109, %s112
      %p118 = scmp.eq.s32.totalorder %s12, 0
      %p119 = por %p117, %p118
      %p120 = scmp.ne.s32.totalorder %s109, %s112
      %p121 = scmp.eq.s32.totalorder %s17, 3
      %p122 = por %p120, %p121
      %p123 = scmp.ne.s32.totalorder %s112, %s113
      %p124 = scmp.eq.s32.totalorder %s17, 0
      %p125 = por %p123, %p124
      %p126 = scmp.ne.s32.totalorder %s112, %s113
      %p127 = scmp.eq.s32.totalorder %s18, 3
      %p128 = por %p126, %p127
      %p130 = scmp.ne.s32.totalorder %s113, %s129
      %p131 = scmp.eq.s32.totalorder %s18, 0
      %p132 = por %p130, %p131
      %p133 = scmp.le.s32.totalorder 1, %s12
      %p134 = scmp.lt.s32.totalorder %s12, 5
      %p135 = pnand %p133, %p134
      %p136 = pneg %p135
      // Predicated region
      $region9: #{_lambda_.1} parent=5 // pred_check
        _
      $region10: #{_lambda_.1} parent=5 // pred_check_branch
        %138 = sbr.rel (%p135) target = $region12
      $region11: #{_lambda_.1} parent=5 // pred_region
        %s139 = ssub.s32 %s12, 1
        // Predicated region
        $region13: #{_lambda_.1} parent=11 // pred_check
          %p140 = pneg %p99
        $region14: #{_lambda_.1} parent=11 // pred_check_branch
          %142 = sbr.rel (%p140) target = $region16
        $region15: #{_lambda_.1} parent=11 // pred_region
          _
        $region16: #{_lambda_.1} parent=11 // pred_fallthru
          _
      $region12: #{_lambda_.1} parent=5 // pred_fallthru
        _
      %p143 = scmp.lt.s32.totalorder %s12, 4
      // Predicated region
      $region17: #{_lambda_.1} parent=5 // pred_check
        %p144 = pneg %p143
      $region18: #{_lambda_.1} parent=5 // pred_check_branch
        %146 = sbr.rel (%p144) target = $region20
      $region19: #{_lambda_.1} parent=5 // pred_region
        // Predicated region
        $region21: #{_lambda_.1} parent=19 // pred_check
          %p147 = pneg %p46
        $region22: #{_lambda_.1} parent=19 // pred_check_branch
          %149 = sbr.rel (%p147) target = $region24
        $region23: #{_lambda_.1} parent=19 // pred_region
          %s150 = sand.u32 %s36, 1
          %s151 = sand.u32 %s36, 1
          %s152 = smul.addr %s151, 1536
          %s153 = scalar_lea.vmem [#allocation3], %s152
          %s154 = smul.u32 8, %s19
          %s155 = smul.u32 24, %s20
          %s156 = ssub.s32 10, %s154
          %p157 = scmp.lt.s32.totalorder %s156, 8
          %s158 = scalar_select %p157, %s156, 8
          %s159 = smul.u32 128, %s158
          %s160 = smul.u32 %s159, 24
          %p161 = scmp.ne.s32.totalorder 0, %s160
          %s162 = smul.addr %s154, 48
          %s163 = sadd.s32 %s155, %s162
          %s164 = smul.addr %s163, 8
          %s165 = scalar_lea.vmem %s0, %s164
          // Predicated region
          $region25: #{_lambda_.1} parent=23 // pred_check
            %p166 = pneg %p161
          $region26: #{_lambda_.1} parent=23 // pred_check_branch
            %168 = sbr.rel (%p166) target = $region28
          $region27: #{_lambda_.1} parent=23 // pred_region
            // Predicated region
            $region29: #{_lambda_.1} parent=27 // pred_check
              _
            $region30: #{_lambda_.1} parent=27 // pred_check_branch
              %170 = sbr.rel (0) target = $region32
            $region31: #{_lambda_.1} parent=27 // pred_region
              // Predicated region
              $region51: #{_lambda_.1} parent=31 // pred_check
                _
              $region52: #{_lambda_.1} parent=31 // pred_check_branch
                %409 = sbr.rel (0) target = $region54
              $region53: #{_lambda_.1} parent=31 // pred_region
                %s410 = sdiv.u32.pop %s158, 3
                %s411 = srem.u32.pop %s158, 3
                // While loop
                $region55: #{_lambda_.1} parent=53 // loop_pre_header
                  _
                $region56: #{_lambda_.1} parent=53 // loop_header
                  %s413 = sphi 0, %s415
                  %p414 = scmp.ge.s32.totalorder %s413, %s410
                  %s418 = sphi 0, %s567
                  %s419 = sphi %s165, %s570
                  %s420 = sphi %s153, %s571
                $region57: #{_lambda_.1} parent=53 // loop_header_branch
                  %417 = sbr.rel (%p414) target = $region61
                $region58: #{_lambda_.1} parent=53 // loop_body
                  %v421 = vld [vmem:[%s419] sm:$0xff]
                  %422 = vst [vmem:[%s420] sm:$0xff] %v421
                  %v423 = vld [vmem:[%s419 + $0x180] sm:$0xff]
                  %424 = vst [vmem:[%s420 + $0xc0] sm:$0xff] %v423
                  %v425 = vld [vmem:[%s419 + $0x300] sm:$0xff]
                  %426 = vst [vmem:[%s420 + $0x180] sm:$0xff] %v425
                  %v427 = vld [vmem:[%s419 + $0x8] sm:$0xff]
                  %428 = vst [vmem:[%s420 + $0x8] sm:$0xff] %v427
                  %v429 = vld [vmem:[%s419 + $0x188] sm:$0xff]
                  %430 = vst [vmem:[%s420 + $0xc8] sm:$0xff] %v429
                  %v431 = vld [vmem:[%s419 + $0x308] sm:$0xff]
                  %432 = vst [vmem:[%s420 + $0x188] sm:$0xff] %v431
                  %v433 = vld [vmem:[%s419 + $0x10] sm:$0xff]
                  %434 = vst [vmem:[%s420 + $0x10] sm:$0xff] %v433
                  %v435 = vld [vmem:[%s419 + $0x190] sm:$0xff]
                  %436 = vst [vmem:[%s420 + $0xd0] sm:$0xff] %v435
                  %v437 = vld [vmem:[%s419 + $0x310] sm:$0xff]
                  %438 = vst [vmem:[%s420 + $0x190] sm:$0xff] %v437
                  %v439 = vld [vmem:[%s419 + $0x18] sm:$0xff]
                  %440 = vst [vmem:[%s420 + $0x18] sm:$0xff] %v439
                  %v441 = vld [vmem:[%s419 + $0x198] sm:$0xff]
                  %442 = vst [vmem:[%s420 + $0xd8] sm:$0xff] %v441
                  %v443 = vld [vmem:[%s419 + $0x318] sm:$0xff]
                  %444 = vst [vmem:[%s420 + $0x198] sm:$0xff] %v443
                  %v445 = vld [vmem:[%s419 + $0x20] sm:$0xff]
                  %446 = vst [vmem:[%s420 + $0x20] sm:$0xff] %v445
                  %v447 = vld [vmem:[%s419 + $0x1a0] sm:$0xff]
                  %448 = vst [vmem:[%s420 + $0xe0] sm:$0xff] %v447
                  %v449 = vld [vmem:[%s419 + $0x320] sm:$0xff]
                  %450 = vst [vmem:[%s420 + $0x1a0] sm:$0xff] %v449
                  %v451 = vld [vmem:[%s419 + $0x28] sm:$0xff]
                  %452 = vst [vmem:[%s420 + $0x28] sm:$0xff] %v451
                  %v453 = vld [vmem:[%s419 + $0x1a8] sm:$0xff]
                  %454 = vst [vmem:[%s420 + $0xe8] sm:$0xff] %v453
                  %v455 = vld [vmem:[%s419 + $0x328] sm:$0xff]
                  %456 = vst [vmem:[%s420 + $0x1a8] sm:$0xff] %v455
                  %v457 = vld [vmem:[%s419 + $0x30] sm:$0xff]
                  %458 = vst [vmem:[%s420 + $0x30] sm:$0xff] %v457
                  %v459 = vld [vmem:[%s419 + $0x1b0] sm:$0xff]
                  %460 = vst [vmem:[%s420 + $0xf0] sm:$0xff] %v459
                  %v461 = vld [vmem:[%s419 + $0x330] sm:$0xff]
                  %462 = vst [vmem:[%s420 + $0x1b0] sm:$0xff] %v461
                  %v463 = vld [vmem:[%s419 + $0x38] sm:$0xff]
                  %464 = vst [vmem:[%s420 + $0x38] sm:$0xff] %v463
                  %v465 = vld [vmem:[%s419 + $0x1b8] sm:$0xff]
                  %466 = vst [vmem:[%s420 + $0xf8] sm:$0xff] %v465
                  %v467 = vld [vmem:[%s419 + $0x338] sm:$0xff]
                  %468 = vst [vmem:[%s420 + $0x1b8] sm:$0xff] %v467
                  %v469 = vld [vmem:[%s419 + $0x40] sm:$0xff]
                  %470 = vst [vmem:[%s420 + $0x40] sm:$0xff] %v469
                  %v471 = vld [vmem:[%s419 + $0x1c0] sm:$0xff]
                  %472 = vst [vmem:[%s420 + $0x100] sm:$0xff] %v471
                  %v473 = vld [vmem:[%s419 + $0x340] sm:$0xff]
                  %474 = vst [vmem:[%s420 + $0x1c0] sm:$0xff] %v473
                  %v475 = vld [vmem:[%s419 + $0x48] sm:$0xff]
                  %476 = vst [vmem:[%s420 + $0x48] sm:$0xff] %v475
                  %v477 = vld [vmem:[%s419 + $0x1c8] sm:$0xff]
                  %478 = vst [vmem:[%s420 + $0x108] sm:$0xff] %v477
                  %v479 = vld [vmem:[%s419 + $0x348] sm:$0xff]
                  %480 = vst [vmem:[%s420 + $0x1c8] sm:$0xff] %v479
                  %v481 = vld [vmem:[%s419 + $0x50] sm:$0xff]
                  %482 = vst [vmem:[%s420 + $0x50] sm:$0xff] %v481
                  %v483 = vld [vmem:[%s419 + $0x1d0] sm:$0xff]
                  %484 = vst [vmem:[%s420 + $0x110] sm:$0xff] %v483
                  %v485 = vld [vmem:[%s419 + $0x350] sm:$0xff]
                  %486 = vst [vmem:[%s420 + $0x1d0] sm:$0xff] %v485
                  %v487 = vld [vmem:[%s419 + $0x58] sm:$0xff]
                  %488 = vst [vmem:[%s420 + $0x58] sm:$0xff] %v487
                  %v489 = vld [vmem:[%s419 + $0x1d8] sm:$0xff]
                  %490 = vst [vmem:[%s420 + $0x118] sm:$0xff] %v489
                  %v491 = vld [vmem:[%s419 + $0x358] sm:$0xff]
                  %492 = vst [vmem:[%s420 + $0x1d8] sm:$0xff] %v491
                  %v493 = vld [vmem:[%s419 + $0x60] sm:$0xff]
                  %494 = vst [vmem:[%s420 + $0x60] sm:$0xff] %v493
                  %v495 = vld [vmem:[%s419 + $0x1e0] sm:$0xff]
                  %496 = vst [vmem:[%s420 + $0x120] sm:$0xff] %v495
                  %v497 = vld [vmem:[%s419 + $0x360] sm:$0xff]
                  %498 = vst [vmem:[%s420 + $0x1e0] sm:$0xff] %v497
                  %v499 = vld [vmem:[%s419 + $0x68] sm:$0xff]
                  %500 = vst [vmem:[%s420 + $0x68] sm:$0xff] %v499
                  %v501 = vld [vmem:[%s419 + $0x1e8] sm:$0xff]
                  %502 = vst [vmem:[%s420 + $0x128] sm:$0xff] %v501
                  %v503 = vld [vmem:[%s419 + $0x368] sm:$0xff]
                  %504 = vst [vmem:[%s420 + $0x1e8] sm:$0xff] %v503
                  %v505 = vld [vmem:[%s419 + $0x70] sm:$0xff]
                  %506 = vst [vmem:[%s420 + $0x70] sm:$0xff] %v505
                  %v507 = vld [vmem:[%s419 + $0x1f0] sm:$0xff]
                  %508 = vst [vmem:[%s420 + $0x130] sm:$0xff] %v507
                  %v509 = vld [vmem:[%s419 + $0x370] sm:$0xff]
                  %510 = vst [vmem:[%s420 + $0x1f0] sm:$0xff] %v509
                  %v511 = vld [vmem:[%s419 + $0x78] sm:$0xff]
                  %512 = vst [vmem:[%s420 + $0x78] sm:$0xff] %v511
                  %v513 = vld [vmem:[%s419 + $0x1f8] sm:$0xff]
                  %514 = vst [vmem:[%s420 + $0x138] sm:$0xff] %v513
                  %v515 = vld [vmem:[%s419 + $0x378] sm:$0xff]
                  %516 = vst [vmem:[%s420 + $0x1f8] sm:$0xff] %v515
                  %v517 = vld [vmem:[%s419 + $0x80] sm:$0xff]
                  %518 = vst [vmem:[%s420 + $0x80] sm:$0xff] %v517
                  %v519 = vld [vmem:[%s419 + $0x200] sm:$0xff]
                  %520 = vst [vmem:[%s420 + $0x140] sm:$0xff] %v519
                  %v521 = vld [vmem:[%s419 + $0x380] sm:$0xff]
                  %522 = vst [vmem:[%s420 + $0x200] sm:$0xff] %v521
                  %v523 = vld [vmem:[%s419 + $0x88] sm:$0xff]
                  %524 = vst [vmem:[%s420 + $0x88] sm:$0xff] %v523
                  %v525 = vld [vmem:[%s419 + $0x208] sm:$0xff]
                  %526 = vst [vmem:[%s420 + $0x148] sm:$0xff] %v525
                  %v527 = vld [vmem:[%s419 + $0x388] sm:$0xff]
                  %528 = vst [vmem:[%s420 + $0x208] sm:$0xff] %v527
                  %v529 = vld [vmem:[%s419 + $0x90] sm:$0xff]
                  %530 = vst [vmem:[%s420 + $0x90] sm:$0xff] %v529
                  %v531 = vld [vmem:[%s419 + $0x210] sm:$0xff]
                  %532 = vst [vmem:[%s420 + $0x150] sm:$0xff] %v531
                  %v533 = vld [vmem:[%s419 + $0x390] sm:$0xff]
                  %534 = vst [vmem:[%s420 + $0x210] sm:$0xff] %v533
                  %v535 = vld [vmem:[%s419 + $0x98] sm:$0xff]
                  %536 = vst [vmem:[%s420 + $0x98] sm:$0xff] %v535
                  %v537 = vld [vmem:[%s419 + $0x218] sm:$0xff]
                  %538 = vst [vmem:[%s420 + $0x158] sm:$0xff] %v537
                  %v539 = vld [vmem:[%s419 + $0x398] sm:$0xff]
                  %540 = vst [vmem:[%s420 + $0x218] sm:$0xff] %v539
                  %v541 = vld [vmem:[%s419 + $0xa0] sm:$0xff]
                  %542 = vst [vmem:[%s420 + $0xa0] sm:$0xff] %v541
                  %v543 = vld [vmem:[%s419 + $0x220] sm:$0xff]
                  %544 = vst [vmem:[%s420 + $0x160] sm:$0xff] %v543
                  %v545 = vld [vmem:[%s419 + $0x3a0] sm:$0xff]
                  %546 = vst [vmem:[%s420 + $0x220] sm:$0xff] %v545
                  %v547 = vld [vmem:[%s419 + $0xa8] sm:$0xff]
                  %548 = vst [vmem:[%s420 + $0xa8] sm:$0xff] %v547
                  %v549 = vld [vmem:[%s419 + $0x228] sm:$0xff]
                  %550 = vst [vmem:[%s420 + $0x168] sm:$0xff] %v549
                  %v551 = vld [vmem:[%s419 + $0x3a8] sm:$0xff]
                  %552 = vst [vmem:[%s420 + $0x228] sm:$0xff] %v551
                  %v553 = vld [vmem:[%s419 + $0xb0] sm:$0xff]
                  %554 = vst [vmem:[%s420 + $0xb0] sm:$0xff] %v553
                  %v555 = vld [vmem:[%s419 + $0x230] sm:$0xff]
                  %556 = vst [vmem:[%s420 + $0x170] sm:$0xff] %v555
                  %v557 = vld [vmem:[%s419 + $0x3b0] sm:$0xff]
                  %558 = vst [vmem:[%s420 + $0x230] sm:$0xff] %v557
                  %v559 = vld [vmem:[%s419 + $0xb8] sm:$0xff]
                  %560 = vst [vmem:[%s420 + $0xb8] sm:$0xff] %v559
                  %v561 = vld [vmem:[%s419 + $0x238] sm:$0xff]
                  %562 = vst [vmem:[%s420 + $0x178] sm:$0xff] %v561
                  %v563 = vld [vmem:[%s419 + $0x3b8] sm:$0xff]
                  %564 = vst [vmem:[%s420 + $0x238] sm:$0xff] %v563
                  %s565 = sadd.s32 1, %s418
                  %p566 = scmp.ge.s32.totalorder %s565, %s410
                  %s567 = scalar_select %p566, 0, %s565
                  %s568 = smul.u32 %s567, 1152
                  %s569 = smul.u32 %s567, 576
                  %s570 = scalar_lea.vmem %s165, %s568
                  %s571 = scalar_lea.vmem %s153, %s569 [#allocation3]
                $region59: #{_lambda_.1} parent=53 // loop_footer
                  %s415 = sadd.s32 %s413, 1
                $region60: #{_lambda_.1} parent=53 // loop_footer_branch
                  %412 = sbr.rel target = $region56
                $region61: #{_lambda_.1} parent=53 // loop_exit
                  _
                %s572 = sdiv.u32.pop %s158, 3
                %s573 = srem.u32.pop %s158, 3
                %s574 = smul.u32 %s572, 3
                %s575 = smul.u32 384, %s574
                %s576 = scalar_lea.vmem %s165, %s575
                %s577 = smul.u32 192, %s574
                %s578 = scalar_lea.vmem %s153, %s577 [#allocation3]
                // While loop
                $region62: #{_lambda_.1} parent=53 // loop_pre_header
                  _
                $region63: #{_lambda_.1} parent=53 // loop_header
                  %s580 = sphi 0, %s582
                  %p581 = scmp.ge.s32.totalorder %s580, %s573
                  %s585 = sphi 0, %s638
                  %s586 = sphi %s576, %s641
                  %s587 = sphi %s578, %s642
                $region64: #{_lambda_.1} parent=53 // loop_header_branch
                  %584 = sbr.rel (%p581) target = $region68
                $region65: #{_lambda_.1} parent=53 // loop_body
                  %v588 = vld [vmem:[%s586] sm:$0xff]
                  %589 = vst [vmem:[%s587] sm:$0xff] %v588
                  %v590 = vld [vmem:[%s586 + $0x8] sm:$0xff]
                  %591 = vst [vmem:[%s587 + $0x8] sm:$0xff] %v590
                  %v592 = vld [vmem:[%s586 + $0x10] sm:$0xff]
                  %593 = vst [vmem:[%s587 + $0x10] sm:$0xff] %v592
                  %v594 = vld [vmem:[%s586 + $0x18] sm:$0xff]
                  %595 = vst [vmem:[%s587 + $0x18] sm:$0xff] %v594
                  %v596 = vld [vmem:[%s586 + $0x20] sm:$0xff]
                  %597 = vst [vmem:[%s587 + $0x20] sm:$0xff] %v596
                  %v598 = vld [vmem:[%s586 + $0x28] sm:$0xff]
                  %599 = vst [vmem:[%s587 + $0x28] sm:$0xff] %v598
                  %v600 = vld [vmem:[%s586 + $0x30] sm:$0xff]
                  %601 = vst [vmem:[%s587 + $0x30] sm:$0xff] %v600
                  %v602 = vld [vmem:[%s586 + $0x38] sm:$0xff]
                  %603 = vst [vmem:[%s587 + $0x38] sm:$0xff] %v602
                  %v604 = vld [vmem:[%s586 + $0x40] sm:$0xff]
                  %605 = vst [vmem:[%s587 + $0x40] sm:$0xff] %v604
                  %v606 = vld [vmem:[%s586 + $0x48] sm:$0xff]
                  %607 = vst [vmem:[%s587 + $0x48] sm:$0xff] %v606
                  %v608 = vld [vmem:[%s586 + $0x50] sm:$0xff]
                  %609 = vst [vmem:[%s587 + $0x50] sm:$0xff] %v608
                  %v610 = vld [vmem:[%s586 + $0x58] sm:$0xff]
                  %611 = vst [vmem:[%s587 + $0x58] sm:$0xff] %v610
                  %v612 = vld [vmem:[%s586 + $0x60] sm:$0xff]
                  %613 = vst [vmem:[%s587 + $0x60] sm:$0xff] %v612
                  %v614 = vld [vmem:[%s586 + $0x68] sm:$0xff]
                  %615 = vst [vmem:[%s587 + $0x68] sm:$0xff] %v614
                  %v616 = vld [vmem:[%s586 + $0x70] sm:$0xff]
                  %617 = vst [vmem:[%s587 + $0x70] sm:$0xff] %v616
                  %v618 = vld [vmem:[%s586 + $0x78] sm:$0xff]
                  %619 = vst [vmem:[%s587 + $0x78] sm:$0xff] %v618
                  %v620 = vld [vmem:[%s586 + $0x80] sm:$0xff]
                  %621 = vst [vmem:[%s587 + $0x80] sm:$0xff] %v620
                  %v622 = vld [vmem:[%s586 + $0x88] sm:$0xff]
                  %623 = vst [vmem:[%s587 + $0x88] sm:$0xff] %v622
                  %v624 = vld [vmem:[%s586 + $0x90] sm:$0xff]
                  %625 = vst [vmem:[%s587 + $0x90] sm:$0xff] %v624
                  %v626 = vld [vmem:[%s586 + $0x98] sm:$0xff]
                  %627 = vst [vmem:[%s587 + $0x98] sm:$0xff] %v626
                  %v628 = vld [vmem:[%s586 + $0xa0] sm:$0xff]
                  %629 = vst [vmem:[%s587 + $0xa0] sm:$0xff] %v628
                  %v630 = vld [vmem:[%s586 + $0xa8] sm:$0xff]
                  %631 = vst [vmem:[%s587 + $0xa8] sm:$0xff] %v630
                  %v632 = vld [vmem:[%s586 + $0xb0] sm:$0xff]
                  %633 = vst [vmem:[%s587 + $0xb0] sm:$0xff] %v632
                  %v634 = vld [vmem:[%s586 + $0xb8] sm:$0xff]
                  %635 = vst [vmem:[%s587 + $0xb8] sm:$0xff] %v634
                  %s636 = sadd.s32 1, %s585
                  %p637 = scmp.ge.s32.totalorder %s636, %s573
                  %s638 = scalar_select %p637, 0, %s636
                  %s639 = smul.u32 %s638, 384
                  %s640 = smul.u32 %s638, 192
                  %s641 = scalar_lea.vmem %s576, %s639
                  %s642 = scalar_lea.vmem %s578, %s640 [#allocation3]
                $region66: #{_lambda_.1} parent=53 // loop_footer
                  %s582 = sadd.s32 %s580, 1
                $region67: #{_lambda_.1} parent=53 // loop_footer_branch
                  %579 = sbr.rel target = $region63
                $region68: #{_lambda_.1} parent=53 // loop_exit
                  _
              $region54: #{_lambda_.1} parent=31 // pred_fallthru
                _
              // Predicated region
              $region69: #{_lambda_.1} parent=31 // pred_check
                _
              $region70: #{_lambda_.1} parent=31 // pred_check_branch
                %644 = sbr.rel target = $region72
              $region71: #{_lambda_.1} parent=31 // pred_region
                _
              $region72: #{_lambda_.1} parent=31 // pred_fallthru
                _
            $region32: #{_lambda_.1} parent=27 // pred_fallthru
              _
            // Predicated region
            $region33: #{_lambda_.1} parent=27 // pred_check
              _
            $region34: #{_lambda_.1} parent=27 // pred_check_branch
              %172 = sbr.rel target = $region36
            $region35: #{_lambda_.1} parent=27 // pred_region
              %s174 = ssub.s32 256, 1
              %s175 = sdiv.u32.pop %s158, 3
              %s176 = srem.u32.pop %s158, 3
              // While loop
              $region37: #{_lambda_.1} parent=35 // loop_pre_header
                _
              $region38: #{_lambda_.1} parent=35 // loop_header
                %s178 = sphi 0, %s180
                %p179 = scmp.ge.s32.totalorder %s178, %s175
                %s183 = sphi 0, %s332
                %s184 = sphi %s165, %s335
                %s185 = sphi %s153, %s336
              $region39: #{_lambda_.1} parent=35 // loop_header_branch
                %182 = sbr.rel (%p179) target = $region43
              $region40: #{_lambda_.1} parent=35 // loop_body
                %v186 = vld [vmem:[%s184] sm:%s174]
                %187 = vst [vmem:[%s185] sm:%s174] %v186
                %v188 = vld [vmem:[%s184 + $0x180] sm:%s174]
                %189 = vst [vmem:[%s185 + $0xc0] sm:%s174] %v188
                %v190 = vld [vmem:[%s184 + $0x300] sm:%s174]
                %191 = vst [vmem:[%s185 + $0x180] sm:%s174] %v190
                %v192 = vld [vmem:[%s184 + $0x8] sm:%s174]
                %193 = vst [vmem:[%s185 + $0x8] sm:%s174] %v192
                %v194 = vld [vmem:[%s184 + $0x188] sm:%s174]
                %195 = vst [vmem:[%s185 + $0xc8] sm:%s174] %v194
                %v196 = vld [vmem:[%s184 + $0x308] sm:%s174]
                %197 = vst [vmem:[%s185 + $0x188] sm:%s174] %v196
                %v198 = vld [vmem:[%s184 + $0x10] sm:%s174]
                %199 = vst [vmem:[%s185 + $0x10] sm:%s174] %v198
                %v200 = vld [vmem:[%s184 + $0x190] sm:%s174]
                %201 = vst [vmem:[%s185 + $0xd0] sm:%s174] %v200
                %v202 = vld [vmem:[%s184 + $0x310] sm:%s174]
                %203 = vst [vmem:[%s185 + $0x190] sm:%s174] %v202
                %v204 = vld [vmem:[%s184 + $0x18] sm:%s174]
                %205 = vst [vmem:[%s185 + $0x18] sm:%s174] %v204
                %v206 = vld [vmem:[%s184 + $0x198] sm:%s174]
                %207 = vst [vmem:[%s185 + $0xd8] sm:%s174] %v206
                %v208 = vld [vmem:[%s184 + $0x318] sm:%s174]
                %209 = vst [vmem:[%s185 + $0x198] sm:%s174] %v208
                %v210 = vld [vmem:[%s184 + $0x20] sm:%s174]
                %211 = vst [vmem:[%s185 + $0x20] sm:%s174] %v210
                %v212 = vld [vmem:[%s184 + $0x1a0] sm:%s174]
                %213 = vst [vmem:[%s185 + $0xe0] sm:%s174] %v212
                %v214 = vld [vmem:[%s184 + $0x320] sm:%s174]
                %215 = vst [vmem:[%s185 + $0x1a0] sm:%s174] %v214
                %v216 = vld [vmem:[%s184 + $0x28] sm:%s174]
                %217 = vst [vmem:[%s185 + $0x28] sm:%s174] %v216
                %v218 = vld [vmem:[%s184 + $0x1a8] sm:%s174]
                %219 = vst [vmem:[%s185 + $0xe8] sm:%s174] %v218
                %v220 = vld [vmem:[%s184 + $0x328] sm:%s174]
                %221 = vst [vmem:[%s185 + $0x1a8] sm:%s174] %v220
                %v222 = vld [vmem:[%s184 + $0x30] sm:%s174]
                %223 = vst [vmem:[%s185 + $0x30] sm:%s174] %v222
                %v224 = vld [vmem:[%s184 + $0x1b0] sm:%s174]
                %225 = vst [vmem:[%s185 + $0xf0] sm:%s174] %v224
                %v226 = vld [vmem:[%s184 + $0x330] sm:%s174]
                %227 = vst [vmem:[%s185 + $0x1b0] sm:%s174] %v226
                %v228 = vld [vmem:[%s184 + $0x38] sm:%s174]
                %229 = vst [vmem:[%s185 + $0x38] sm:%s174] %v228
                %v230 = vld [vmem:[%s184 + $0x1b8] sm:%s174]
                %231 = vst [vmem:[%s185 + $0xf8] sm:%s174] %v230
                %v232 = vld [vmem:[%s184 + $0x338] sm:%s174]
                %233 = vst [vmem:[%s185 + $0x1b8] sm:%s174] %v232
                %v234 = vld [vmem:[%s184 + $0x40] sm:%s174]
                %235 = vst [vmem:[%s185 + $0x40] sm:%s174] %v234
                %v236 = vld [vmem:[%s184 + $0x1c0] sm:%s174]
                %237 = vst [vmem:[%s185 + $0x100] sm:%s174] %v236
                %v238 = vld [vmem:[%s184 + $0x340] sm:%s174]
                %239 = vst [vmem:[%s185 + $0x1c0] sm:%s174] %v238
                %v240 = vld [vmem:[%s184 + $0x48] sm:%s174]
                %241 = vst [vmem:[%s185 + $0x48] sm:%s174] %v240
                %v242 = vld [vmem:[%s184 + $0x1c8] sm:%s174]
                %243 = vst [vmem:[%s185 + $0x108] sm:%s174] %v242
                %v244 = vld [vmem:[%s184 + $0x348] sm:%s174]
                %245 = vst [vmem:[%s185 + $0x1c8] sm:%s174] %v244
                %v246 = vld [vmem:[%s184 + $0x50] sm:%s174]
                %247 = vst [vmem:[%s185 + $0x50] sm:%s174] %v246
                %v248 = vld [vmem:[%s184 + $0x1d0] sm:%s174]
                %249 = vst [vmem:[%s185 + $0x110] sm:%s174] %v248
                %v250 = vld [vmem:[%s184 + $0x350] sm:%s174]
                %251 = vst [vmem:[%s185 + $0x1d0] sm:%s174] %v250
                %v252 = vld [vmem:[%s184 + $0x58] sm:%s174]
                %253 = vst [vmem:[%s185 + $0x58] sm:%s174] %v252
                %v254 = vld [vmem:[%s184 + $0x1d8] sm:%s174]
                %255 = vst [vmem:[%s185 + $0x118] sm:%s174] %v254
                %v256 = vld [vmem:[%s184 + $0x358] sm:%s174]
                %257 = vst [vmem:[%s185 + $0x1d8] sm:%s174] %v256
                %v258 = vld [vmem:[%s184 + $0x60] sm:%s174]
                %259 = vst [vmem:[%s185 + $0x60] sm:%s174] %v258
                %v260 = vld [vmem:[%s184 + $0x1e0] sm:%s174]
                %261 = vst [vmem:[%s185 + $0x120] sm:%s174] %v260
                %v262 = vld [vmem:[%s184 + $0x360] sm:%s174]
                %263 = vst [vmem:[%s185 + $0x1e0] sm:%s174] %v262
                %v264 = vld [vmem:[%s184 + $0x68] sm:%s174]
                %265 = vst [vmem:[%s185 + $0x68] sm:%s174] %v264
                %v266 = vld [vmem:[%s184 + $0x1e8] sm:%s174]
                %267 = vst [vmem:[%s185 + $0x128] sm:%s174] %v266
                %v268 = vld [vmem:[%s184 + $0x368] sm:%s174]
                %269 = vst [vmem:[%s185 + $0x1e8] sm:%s174] %v268
                %v270 = vld [vmem:[%s184 + $0x70] sm:%s174]
                %271 = vst [vmem:[%s185 + $0x70] sm:%s174] %v270
                %v272 = vld [vmem:[%s184 + $0x1f0] sm:%s174]
                %273 = vst [vmem:[%s185 + $0x130] sm:%s174] %v272
                %v274 = vld [vmem:[%s184 + $0x370] sm:%s174]
                %275 = vst [vmem:[%s185 + $0x1f0] sm:%s174] %v274
                %v276 = vld [vmem:[%s184 + $0x78] sm:%s174]
                %277 = vst [vmem:[%s185 + $0x78] sm:%s174] %v276
                %v278 = vld [vmem:[%s184 + $0x1f8] sm:%s174]
                %279 = vst [vmem:[%s185 + $0x138] sm:%s174] %v278
                %v280 = vld [vmem:[%s184 + $0x378] sm:%s174]
                %281 = vst [vmem:[%s185 + $0x1f8] sm:%s174] %v280
                %v282 = vld [vmem:[%s184 + $0x80] sm:%s174]
                %283 = vst [vmem:[%s185 + $0x80] sm:%s174] %v282
                %v284 = vld [vmem:[%s184 + $0x200] sm:%s174]
                %285 = vst [vmem:[%s185 + $0x140] sm:%s174] %v284
                %v286 = vld [vmem:[%s184 + $0x380] sm:%s174]
                %287 = vst [vmem:[%s185 + $0x200] sm:%s174] %v286
                %v288 = vld [vmem:[%s184 + $0x88] sm:%s174]
                %289 = vst [vmem:[%s185 + $0x88] sm:%s174] %v288
                %v290 = vld [vmem:[%s184 + $0x208] sm:%s174]
                %291 = vst [vmem:[%s185 + $0x148] sm:%s174] %v290
                %v292 = vld [vmem:[%s184 + $0x388] sm:%s174]
                %293 = vst [vmem:[%s185 + $0x208] sm:%s174] %v292
                %v294 = vld [vmem:[%s184 + $0x90] sm:%s174]
                %295 = vst [vmem:[%s185 + $0x90] sm:%s174] %v294
                %v296 = vld [vmem:[%s184 + $0x210] sm:%s174]
                %297 = vst [vmem:[%s185 + $0x150] sm:%s174] %v296
                %v298 = vld [vmem:[%s184 + $0x390] sm:%s174]
                %299 = vst [vmem:[%s185 + $0x210] sm:%s174] %v298
                %v300 = vld [vmem:[%s184 + $0x98] sm:%s174]
                %301 = vst [vmem:[%s185 + $0x98] sm:%s174] %v300
                %v302 = vld [vmem:[%s184 + $0x218] sm:%s174]
                %303 = vst [vmem:[%s185 + $0x158] sm:%s174] %v302
                %v304 = vld [vmem:[%s184 + $0x398] sm:%s174]
                %305 = vst [vmem:[%s185 + $0x218] sm:%s174] %v304
                %v306 = vld [vmem:[%s184 + $0xa0] sm:%s174]
                %307 = vst [vmem:[%s185 + $0xa0] sm:%s174] %v306
                %v308 = vld [vmem:[%s184 + $0x220] sm:%s174]
                %309 = vst [vmem:[%s185 + $0x160] sm:%s174] %v308
                %v310 = vld [vmem:[%s184 + $0x3a0] sm:%s174]
                %311 = vst [vmem:[%s185 + $0x220] sm:%s174] %v310
                %v312 = vld [vmem:[%s184 + $0xa8] sm:%s174]
                %313 = vst [vmem:[%s185 + $0xa8] sm:%s174] %v312
                %v314 = vld [vmem:[%s184 + $0x228] sm:%s174]
                %315 = vst [vmem:[%s185 + $0x168] sm:%s174] %v314
                %v316 = vld [vmem:[%s184 + $0x3a8] sm:%s174]
                %317 = vst [vmem:[%s185 + $0x228] sm:%s174] %v316
                %v318 = vld [vmem:[%s184 + $0xb0] sm:%s174]
                %319 = vst [vmem:[%s185 + $0xb0] sm:%s174] %v318
                %v320 = vld [vmem:[%s184 + $0x230] sm:%s174]
                %321 = vst [vmem:[%s185 + $0x170] sm:%s174] %v320
                %v322 = vld [vmem:[%s184 + $0x3b0] sm:%s174]
                %323 = vst [vmem:[%s185 + $0x230] sm:%s174] %v322
                %v324 = vld [vmem:[%s184 + $0xb8] sm:%s174]
                %325 = vst [vmem:[%s185 + $0xb8] sm:%s174] %v324
                %v326 = vld [vmem:[%s184 + $0x238] sm:%s174]
                %327 = vst [vmem:[%s185 + $0x178] sm:%s174] %v326
                %v328 = vld [vmem:[%s184 + $0x3b8] sm:%s174]
                %329 = vst [vmem:[%s185 + $0x238] sm:%s174] %v328
                %s330 = sadd.s32 1, %s183
                %p331 = scmp.ge.s32.totalorder %s330, %s175
                %s332 = scalar_select %p331, 0, %s330
                %s333 = smul.u32 %s332, 1152
                %s334 = smul.u32 %s332, 576
                %s335 = scalar_lea.vmem %s165, %s333
                %s336 = scalar_lea.vmem %s153, %s334 [#allocation3]
              $region41: #{_lambda_.1} parent=35 // loop_footer
                %s180 = sadd.s32 %s178, 1
              $region42: #{_lambda_.1} parent=35 // loop_footer_branch
                %177 = sbr.rel target = $region38
              $region43: #{_lambda_.1} parent=35 // loop_exit
                _
              %s337 = sdiv.u32.pop %s158, 3
              %s338 = srem.u32.pop %s158, 3
              %s339 = smul.u32 %s337, 3
              %s340 = smul.u32 384, %s339
              %s341 = scalar_lea.vmem %s165, %s340
              %s342 = smul.u32 192, %s339
              %s343 = scalar_lea.vmem %s153, %s342 [#allocation3]
              // While loop
              $region44: #{_lambda_.1} parent=35 // loop_pre_header
                _
              $region45: #{_lambda_.1} parent=35 // loop_header
                %s345 = sphi 0, %s347
                %p346 = scmp.ge.s32.totalorder %s345, %s338
                %s350 = sphi 0, %s403
                %s351 = sphi %s341, %s406
                %s352 = sphi %s343, %s407
              $region46: #{_lambda_.1} parent=35 // loop_header_branch
                %349 = sbr.rel (%p346) target = $region50
              $region47: #{_lambda_.1} parent=35 // loop_body
                %v353 = vld [vmem:[%s351] sm:%s174]
                %354 = vst [vmem:[%s352] sm:%s174] %v353
                %v355 = vld [vmem:[%s351 + $0x8] sm:%s174]
                %356 = vst [vmem:[%s352 + $0x8] sm:%s174] %v355
                %v357 = vld [vmem:[%s351 + $0x10] sm:%s174]
                %358 = vst [vmem:[%s352 + $0x10] sm:%s174] %v357
                %v359 = vld [vmem:[%s351 + $0x18] sm:%s174]
                %360 = vst [vmem:[%s352 + $0x18] sm:%s174] %v359
                %v361 = vld [vmem:[%s351 + $0x20] sm:%s174]
                %362 = vst [vmem:[%s352 + $0x20] sm:%s174] %v361
                %v363 = vld [vmem:[%s351 + $0x28] sm:%s174]
                %364 = vst [vmem:[%s352 + $0x28] sm:%s174] %v363
                %v365 = vld [vmem:[%s351 + $0x30] sm:%s174]
                %366 = vst [vmem:[%s352 + $0x30] sm:%s174] %v365
                %v367 = vld [vmem:[%s351 + $0x38] sm:%s174]
                %368 = vst [vmem:[%s352 + $0x38] sm:%s174] %v367
                %v369 = vld [vmem:[%s351 + $0x40] sm:%s174]
                %370 = vst [vmem:[%s352 + $0x40] sm:%s174] %v369
                %v371 = vld [vmem:[%s351 + $0x48] sm:%s174]
                %372 = vst [vmem:[%s352 + $0x48] sm:%s174] %v371
                %v373 = vld [vmem:[%s351 + $0x50] sm:%s174]
                %374 = vst [vmem:[%s352 + $0x50] sm:%s174] %v373
                %v375 = vld [vmem:[%s351 + $0x58] sm:%s174]
                %376 = vst [vmem:[%s352 + $0x58] sm:%s174] %v375
                %v377 = vld [vmem:[%s351 + $0x60] sm:%s174]
                %378 = vst [vmem:[%s352 + $0x60] sm:%s174] %v377
                %v379 = vld [vmem:[%s351 + $0x68] sm:%s174]
                %380 = vst [vmem:[%s352 + $0x68] sm:%s174] %v379
                %v381 = vld [vmem:[%s351 + $0x70] sm:%s174]
                %382 = vst [vmem:[%s352 + $0x70] sm:%s174] %v381
                %v383 = vld [vmem:[%s351 + $0x78] sm:%s174]
                %384 = vst [vmem:[%s352 + $0x78] sm:%s174] %v383
                %v385 = vld [vmem:[%s351 + $0x80] sm:%s174]
                %386 = vst [vmem:[%s352 + $0x80] sm:%s174] %v385
                %v387 = vld [vmem:[%s351 + $0x88] sm:%s174]
                %388 = vst [vmem:[%s352 + $0x88] sm:%s174] %v387
                %v389 = vld [vmem:[%s351 + $0x90] sm:%s174]
                %390 = vst [vmem:[%s352 + $0x90] sm:%s174] %v389
                %v391 = vld [vmem:[%s351 + $0x98] sm:%s174]
                %392 = vst [vmem:[%s352 + $0x98] sm:%s174] %v391
                %v393 = vld [vmem:[%s351 + $0xa0] sm:%s174]
                %394 = vst [vmem:[%s352 + $0xa0] sm:%s174] %v393
                %v395 = vld [vmem:[%s351 + $0xa8] sm:%s174]
                %396 = vst [vmem:[%s352 + $0xa8] sm:%s174] %v395
                %v397 = vld [vmem:[%s351 + $0xb0] sm:%s174]
                %398 = vst [vmem:[%s352 + $0xb0] sm:%s174] %v397
                %v399 = vld [vmem:[%s351 + $0xb8] sm:%s174]
                %400 = vst [vmem:[%s352 + $0xb8] sm:%s174] %v399
                %s401 = sadd.s32 1, %s350
                %p402 = scmp.ge.s32.totalorder %s401, %s338
                %s403 = scalar_select %p402, 0, %s401
                %s404 = smul.u32 %s403, 384
                %s405 = smul.u32 %s403, 192
                %s406 = scalar_lea.vmem %s341, %s404
                %s407 = scalar_lea.vmem %s343, %s405 [#allocation3]
              $region48: #{_lambda_.1} parent=35 // loop_footer
                %s347 = sadd.s32 %s345, 1
              $region49: #{_lambda_.1} parent=35 // loop_footer_branch
                %344 = sbr.rel target = $region45
              $region50: #{_lambda_.1} parent=35 // loop_exit
                _
            $region36: #{_lambda_.1} parent=27 // pred_fallthru
              _
          $region28: #{_lambda_.1} parent=23 // pred_fallthru
            _
          %645 = vnop
        $region24: #{_lambda_.1} parent=19 // pred_fallthru
          _
        // Predicated region
        $region73: #{_lambda_.1} parent=19 // pred_check
          %p646 = pneg %p72
        $region74: #{_lambda_.1} parent=19 // pred_check_branch
          %648 = sbr.rel (%p646) target = $region76
        $region75: #{_lambda_.1} parent=19 // pred_region
          %s649 = smul.u32 24, %s20
          %p650 = scmp.lt.s32.totalorder %s649, 47
          %s651 = scalar_select %p650, %s649, 47
          %s652 = smul.addr %s651, 8
          %s653 = scalar_lea.vmem %s1, %s652
          %s654 = smul.u32 24, %s20
        $region76: #{_lambda_.1} parent=19 // pred_fallthru
          _
      $region20: #{_lambda_.1} parent=5 // pred_fallthru
        _
      %p655 = scmp.le.s32.totalorder 1, %s12
      %p656 = scmp.lt.s32.totalorder %s12, 5
      %p657 = pnand %p655, %p656
      %p658 = pneg %p657
      // Predicated region
      $region77: #{_lambda_.1} parent=5 // pred_check
        _
      $region78: #{_lambda_.1} parent=5 // pred_check_branch
        %660 = sbr.rel (%p657) target = $region80
      $region79: #{_lambda_.1} parent=5 // pred_region
        %s661 = ssub.s32 %s12, 1
        %s662 = sand.u32 %s39, 1
        %s663 = sand.u32 %s39, 1
        %s664 = smul.addr %s663, 1536
        %s665 = scalar_lea.vmem [#allocation3], %s664
        // Predicated region
        $region81: #{_lambda_.1} parent=79 // pred_check
          %p666 = pneg %p52
        $region82: #{_lambda_.1} parent=79 // pred_check_branch
          %668 = sbr.rel (%p666) target = $region84
        $region83: #{_lambda_.1} parent=79 // pred_region
          _
        $region84: #{_lambda_.1} parent=79 // pred_fallthru
          _
        %s669 = sand.u32 %s39, 1
        %s670 = sand.u32 %s39, 1
        %s671 = smul.addr %s670, 1536
        %s672 = scalar_lea.vmem [#allocation3], %s671
        %p673 = pneg %p52
        %p674 = pneg %p49
        %s675 = smul.u32 24, %s22
        %p676 = scmp.lt.s32.totalorder %s675, 47
        %s677 = scalar_select %p676, %s675, 47
        %s678 = smul.addr %s677, 8
        %s679 = scalar_lea.vmem %s1, %s678
        %p680 = pneg %p78
        %p681 = pneg %p75
        %p682 = pneg %p99
        %p683 = pneg %p96
        %p684 = pneg %p125
        %p685 = pneg %p122
        %s686 = sand.u32 %s112, 1
        %s687 = scalar_lea.sflag [#allocation5], %s686
        %s688 = sand.u32 %s112, 1
        %s689 = smul.addr %s688, 8
        %s690 = scalar_lea.vmem [#allocation4], %s689
        %s691 = smul.u32 8, %s21
        %s692 = smul.u32 24, %s22
        %s693 = ssub.s32 10, %s691
        %p694 = scmp.lt.s32.totalorder %s693, 8
        %s695 = scalar_select %p694, %s693, 8
        %s696 = smul.u32 128, %s695
        %s697 = smul.u32 %s696, 24
        %s698 = smul.u32 24, %s22
        %p699 = scmp.lt.s32.totalorder %s698, 47
        %s700 = scalar_select %p699, %s698, 47
        %s701 = smul.addr %s700, 8
        %s702 = scalar_lea.vmem %s1, %s701
        %s703 = smul.u32 24, %s22
        %p704 = scmp.eq.s32.totalorder %s22, 0
        // Predicated region
        $region85: #{_lambda_.1} parent=79 // pred_check
          %p705 = pneg %p704
        $region86: #{_lambda_.1} parent=79 // pred_check_branch
          %707 = sbr.rel (%p705) target = $region88
        $region87: #{_lambda_.1} parent=79 // pred_region
          %708 = vst [vmem:[#allocation2] sm:$0xff] 0.0
        $region88: #{_lambda_.1} parent=79 // pred_fallthru
          _
        %v709 = vld [vmem:[%s665] sm:$0xff]
        %v710 = vld [vmem:[%s665 + $0x8] sm:$0xff]
        %v711 = vld [vmem:[%s665 + $0x10] sm:$0xff]
        %v712 = vld [vmem:[%s665 + $0x18] sm:$0xff]
        %v713 = vld [vmem:[%s665 + $0x20] sm:$0xff]
        %v714 = vld [vmem:[%s665 + $0x28] sm:$0xff]
        %v715 = vld [vmem:[%s665 + $0x30] sm:$0xff]
        %v716 = vld [vmem:[%s665 + $0x38] sm:$0xff]
        %v717 = vld [vmem:[%s665 + $0x40] sm:$0xff]
        %v718 = vld [vmem:[%s665 + $0x48] sm:$0xff]
        %v719 = vld [vmem:[%s665 + $0x50] sm:$0xff]
        %v720 = vld [vmem:[%s665 + $0x58] sm:$0xff]
        %v721 = vld [vmem:[%s665 + $0x60] sm:$0xff]
        %v722 = vld [vmem:[%s665 + $0x68] sm:$0xff]
        %v723 = vld [vmem:[%s665 + $0x70] sm:$0xff]
        %v724 = vld [vmem:[%s665 + $0x78] sm:$0xff]
        %v725 = vld [vmem:[%s665 + $0x80] sm:$0xff]
        %v726 = vld [vmem:[%s665 + $0x88] sm:$0xff]
        %v727 = vld [vmem:[%s665 + $0x90] sm:$0xff]
        %v728 = vld [vmem:[%s665 + $0x98] sm:$0xff]
        %v729 = vld [vmem:[%s665 + $0xa0] sm:$0xff]
        %v730 = vld [vmem:[%s665 + $0xa8] sm:$0xff]
        %v731 = vld [vmem:[%s665 + $0xb0] sm:$0xff]
        %v732 = vld [vmem:[%s665 + $0xb8] sm:$0xff]
        %v733 = vld [vmem:[%s665 + $0xc0] sm:$0xff]
        %v734 = vld [vmem:[%s665 + $0xc8] sm:$0xff]
        %v735 = vld [vmem:[%s665 + $0xd0] sm:$0xff]
        %v736 = vld [vmem:[%s665 + $0xd8] sm:$0xff]
        %v737 = vld [vmem:[%s665 + $0xe0] sm:$0xff]
        %v738 = vld [vmem:[%s665 + $0xe8] sm:$0xff]
        %v739 = vld [vmem:[%s665 + $0xf0] sm:$0xff]
        %v740 = vld [vmem:[%s665 + $0xf8] sm:$0xff]
        %v741 = vld [vmem:[%s665 + $0x100] sm:$0xff]
        %v742 = vld [vmem:[%s665 + $0x108] sm:$0xff]
        %v743 = vld [vmem:[%s665 + $0x110] sm:$0xff]
        %v744 = vld [vmem:[%s665 + $0x118] sm:$0xff]
        %v745 = vld [vmem:[%s665 + $0x120] sm:$0xff]
        %v746 = vld [vmem:[%s665 + $0x128] sm:$0xff]
        %v747 = vld [vmem:[%s665 + $0x130] sm:$0xff]
        %v748 = vld [vmem:[%s665 + $0x138] sm:$0xff]
        %v749 = vld [vmem:[%s665 + $0x140] sm:$0xff]
        %v750 = vld [vmem:[%s665 + $0x148] sm:$0xff]
        %v751 = vld [vmem:[%s665 + $0x150] sm:$0xff]
        %v752 = vld [vmem:[%s665 + $0x158] sm:$0xff]
        %v753 = vld [vmem:[%s665 + $0x160] sm:$0xff]
        %v754 = vld [vmem:[%s665 + $0x168] sm:$0xff]
        %v755 = vld [vmem:[%s665 + $0x170] sm:$0xff]
        %v756 = vld [vmem:[%s665 + $0x178] sm:$0xff]
        %v757 = vld [vmem:[%s665 + $0x180] sm:$0xff]
        %v758 = vld [vmem:[%s665 + $0x188] sm:$0xff]
        %v759 = vld [vmem:[%s665 + $0x190] sm:$0xff]
        %v760 = vld [vmem:[%s665 + $0x198] sm:$0xff]
        %v761 = vld [vmem:[%s665 + $0x1a0] sm:$0xff]
        %v762 = vld [vmem:[%s665 + $0x1a8] sm:$0xff]
        %v763 = vld [vmem:[%s665 + $0x1b0] sm:$0xff]
        %v764 = vld [vmem:[%s665 + $0x1b8] sm:$0xff]
        %v765 = vld [vmem:[%s665 + $0x1c0] sm:$0xff]
        %v766 = vld [vmem:[%s665 + $0x1c8] sm:$0xff]
        %v767 = vld [vmem:[%s665 + $0x1d0] sm:$0xff]
        %v768 = vld [vmem:[%s665 + $0x1d8] sm:$0xff]
        %v769 = vld [vmem:[%s665 + $0x1e0] sm:$0xff]
        %v770 = vld [vmem:[%s665 + $0x1e8] sm:$0xff]
        %v771 = vld [vmem:[%s665 + $0x1f0] sm:$0xff]
        %v772 = vld [vmem:[%s665 + $0x1f8] sm:$0xff]
        %v773 = vld [vmem:[%s665 + $0x200] sm:$0xff]
        %v774 = vld [vmem:[%s665 + $0x208] sm:$0xff]
        %v775 = vld [vmem:[%s665 + $0x210] sm:$0xff]
        %v776 = vld [vmem:[%s665 + $0x218] sm:$0xff]
        %v777 = vld [vmem:[%s665 + $0x220] sm:$0xff]
        %v778 = vld [vmem:[%s665 + $0x228] sm:$0xff]
        %v779 = vld [vmem:[%s665 + $0x230] sm:$0xff]
        %v780 = vld [vmem:[%s665 + $0x238] sm:$0xff]
        %v781 = vld [vmem:[%s665 + $0x240] sm:$0xff]
        %v782 = vld [vmem:[%s665 + $0x248] sm:$0xff]
        %v783 = vld [vmem:[%s665 + $0x250] sm:$0xff]
        %v784 = vld [vmem:[%s665 + $0x258] sm:$0xff]
        %v785 = vld [vmem:[%s665 + $0x260] sm:$0xff]
        %v786 = vld [vmem:[%s665 + $0x268] sm:$0xff]
        %v787 = vld [vmem:[%s665 + $0x270] sm:$0xff]
        %v788 = vld [vmem:[%s665 + $0x278] sm:$0xff]
        %v789 = vld [vmem:[%s665 + $0x280] sm:$0xff]
        %v790 = vld [vmem:[%s665 + $0x288] sm:$0xff]
        %v791 = vld [vmem:[%s665 + $0x290] sm:$0xff]
        %v792 = vld [vmem:[%s665 + $0x298] sm:$0xff]
        %v793 = vld [vmem:[%s665 + $0x2a0] sm:$0xff]
        %v794 = vld [vmem:[%s665 + $0x2a8] sm:$0xff]
        %v795 = vld [vmem:[%s665 + $0x2b0] sm:$0xff]
        %v796 = vld [vmem:[%s665 + $0x2b8] sm:$0xff]
        %v797 = vld [vmem:[%s665 + $0x2c0] sm:$0xff]
        %v798 = vld [vmem:[%s665 + $0x2c8] sm:$0xff]
        %v799 = vld [vmem:[%s665 + $0x2d0] sm:$0xff]
        %v800 = vld [vmem:[%s665 + $0x2d8] sm:$0xff]
        %v801 = vld [vmem:[%s665 + $0x2e0] sm:$0xff]
        %v802 = vld [vmem:[%s665 + $0x2e8] sm:$0xff]
        %v803 = vld [vmem:[%s665 + $0x2f0] sm:$0xff]
        %v804 = vld [vmem:[%s665 + $0x2f8] sm:$0xff]
        %v805 = vld [vmem:[%s665 + $0x300] sm:$0xff]
        %v806 = vld [vmem:[%s665 + $0x308] sm:$0xff]
        %v807 = vld [vmem:[%s665 + $0x310] sm:$0xff]
        %v808 = vld [vmem:[%s665 + $0x318] sm:$0xff]
        %v809 = vld [vmem:[%s665 + $0x320] sm:$0xff]
        %v810 = vld [vmem:[%s665 + $0x328] sm:$0xff]
        %v811 = vld [vmem:[%s665 + $0x330] sm:$0xff]
        %v812 = vld [vmem:[%s665 + $0x338] sm:$0xff]
        %v813 = vld [vmem:[%s665 + $0x340] sm:$0xff]
        %v814 = vld [vmem:[%s665 + $0x348] sm:$0xff]
        %v815 = vld [vmem:[%s665 + $0x350] sm:$0xff]
        %v816 = vld [vmem:[%s665 + $0x358] sm:$0xff]
        %v817 = vld [vmem:[%s665 + $0x360] sm:$0xff]
        %v818 = vld [vmem:[%s665 + $0x368] sm:$0xff]
        %v819 = vld [vmem:[%s665 + $0x370] sm:$0xff]
        %v820 = vld [vmem:[%s665 + $0x378] sm:$0xff]
        %v821 = vld [vmem:[%s665 + $0x380] sm:$0xff]
        %v822 = vld [vmem:[%s665 + $0x388] sm:$0xff]
        %v823 = vld [vmem:[%s665 + $0x390] sm:$0xff]
        %v824 = vld [vmem:[%s665 + $0x398] sm:$0xff]
        %v825 = vld [vmem:[%s665 + $0x3a0] sm:$0xff]
        %v826 = vld [vmem:[%s665 + $0x3a8] sm:$0xff]
        %v827 = vld [vmem:[%s665 + $0x3b0] sm:$0xff]
        %v828 = vld [vmem:[%s665 + $0x3b8] sm:$0xff]
        %v829 = vld [vmem:[%s665 + $0x3c0] sm:$0xff]
        %v830 = vld [vmem:[%s665 + $0x3c8] sm:$0xff]
        %v831 = vld [vmem:[%s665 + $0x3d0] sm:$0xff]
        %v832 = vld [vmem:[%s665 + $0x3d8] sm:$0xff]
        %v833 = vld [vmem:[%s665 + $0x3e0] sm:$0xff]
        %v834 = vld [vmem:[%s665 + $0x3e8] sm:$0xff]
        %v835 = vld [vmem:[%s665 + $0x3f0] sm:$0xff]
        %v836 = vld [vmem:[%s665 + $0x3f8] sm:$0xff]
        %v837 = vld [vmem:[%s665 + $0x400] sm:$0xff]
        %v838 = vld [vmem:[%s665 + $0x408] sm:$0xff]
        %v839 = vld [vmem:[%s665 + $0x410] sm:$0xff]
        %v840 = vld [vmem:[%s665 + $0x418] sm:$0xff]
        %v841 = vld [vmem:[%s665 + $0x420] sm:$0xff]
        %v842 = vld [vmem:[%s665 + $0x428] sm:$0xff]
        %v843 = vld [vmem:[%s665 + $0x430] sm:$0xff]
        %v844 = vld [vmem:[%s665 + $0x438] sm:$0xff]
        %v845 = vld [vmem:[%s665 + $0x440] sm:$0xff]
        %v846 = vld [vmem:[%s665 + $0x448] sm:$0xff]
        %v847 = vld [vmem:[%s665 + $0x450] sm:$0xff]
        %v848 = vld [vmem:[%s665 + $0x458] sm:$0xff]
        %v849 = vld [vmem:[%s665 + $0x460] sm:$0xff]
        %v850 = vld [vmem:[%s665 + $0x468] sm:$0xff]
        %v851 = vld [vmem:[%s665 + $0x470] sm:$0xff]
        %v852 = vld [vmem:[%s665 + $0x478] sm:$0xff]
        %v853 = vld [vmem:[%s665 + $0x480] sm:$0xff]
        %v854 = vld [vmem:[%s665 + $0x488] sm:$0xff]
        %v855 = vld [vmem:[%s665 + $0x490] sm:$0xff]
        %v856 = vld [vmem:[%s665 + $0x498] sm:$0xff]
        %v857 = vld [vmem:[%s665 + $0x4a0] sm:$0xff]
        %v858 = vld [vmem:[%s665 + $0x4a8] sm:$0xff]
        %v859 = vld [vmem:[%s665 + $0x4b0] sm:$0xff]
        %v860 = vld [vmem:[%s665 + $0x4b8] sm:$0xff]
        %v861 = vld [vmem:[%s665 + $0x4c0] sm:$0xff]
        %v862 = vld [vmem:[%s665 + $0x4c8] sm:$0xff]
        %v863 = vld [vmem:[%s665 + $0x4d0] sm:$0xff]
        %v864 = vld [vmem:[%s665 + $0x4d8] sm:$0xff]
        %v865 = vld [vmem:[%s665 + $0x4e0] sm:$0xff]
        %v866 = vld [vmem:[%s665 + $0x4e8] sm:$0xff]
        %v867 = vld [vmem:[%s665 + $0x4f0] sm:$0xff]
        %v868 = vld [vmem:[%s665 + $0x4f8] sm:$0xff]
        %v869 = vld [vmem:[%s665 + $0x500] sm:$0xff]
        %v870 = vld [vmem:[%s665 + $0x508] sm:$0xff]
        %v871 = vld [vmem:[%s665 + $0x510] sm:$0xff]
        %v872 = vld [vmem:[%s665 + $0x518] sm:$0xff]
        %v873 = vld [vmem:[%s665 + $0x520] sm:$0xff]
        %v874 = vld [vmem:[%s665 + $0x528] sm:$0xff]
        %v875 = vld [vmem:[%s665 + $0x530] sm:$0xff]
        %v876 = vld [vmem:[%s665 + $0x538] sm:$0xff]
        %v877 = vld [vmem:[%s665 + $0x540] sm:$0xff]
        %v878 = vld [vmem:[%s665 + $0x548] sm:$0xff]
        %v879 = vld [vmem:[%s665 + $0x550] sm:$0xff]
        %v880 = vld [vmem:[%s665 + $0x558] sm:$0xff]
        %v881 = vld [vmem:[%s665 + $0x560] sm:$0xff]
        %v882 = vld [vmem:[%s665 + $0x568] sm:$0xff]
        %v883 = vld [vmem:[%s665 + $0x570] sm:$0xff]
        %v884 = vld [vmem:[%s665 + $0x578] sm:$0xff]
        %v885 = vld [vmem:[%s665 + $0x580] sm:$0xff]
        %v886 = vld [vmem:[%s665 + $0x588] sm:$0xff]
        %v887 = vld [vmem:[%s665 + $0x590] sm:$0xff]
        %v888 = vld [vmem:[%s665 + $0x598] sm:$0xff]
        %v889 = vld [vmem:[%s665 + $0x5a0] sm:$0xff]
        %v890 = vld [vmem:[%s665 + $0x5a8] sm:$0xff]
        %v891 = vld [vmem:[%s665 + $0x5b0] sm:$0xff]
        %v892 = vld [vmem:[%s665 + $0x5b8] sm:$0xff]
        %v893 = vld [vmem:[%s665 + $0x5c0] sm:$0xff]
        %v894 = vld [vmem:[%s665 + $0x5c8] sm:$0xff]
        %v895 = vld [vmem:[%s665 + $0x5d0] sm:$0xff]
        %v896 = vld [vmem:[%s665 + $0x5d8] sm:$0xff]
        %v897 = vld [vmem:[%s665 + $0x5e0] sm:$0xff]
        %v898 = vld [vmem:[%s665 + $0x5e8] sm:$0xff]
        %v899 = vld [vmem:[%s665 + $0x5f0] sm:$0xff]
        %v900 = vld [vmem:[%s665 + $0x5f8] sm:$0xff]
        %vm901 = vcmask 400384
        %v902 = vsel %vm901, %v709, 0.0
        %903 = vadd.xlane.f32.xlu0 %v902
        %v904 = vpop.xlane.xlu0 %903
        %v905 = vsel %vm901, %v710, 0.0
        %906 = vadd.xlane.f32.xlu0 %v905
        %v907 = vpop.xlane.xlu0 %906
        %v908 = vsel %vm901, %v711, 0.0
        %909 = vadd.xlane.f32.xlu0 %v908
        %v910 = vpop.xlane.xlu0 %909
        %v911 = vsel %vm901, %v712, 0.0
        %912 = vadd.xlane.f32.xlu0 %v911
        %v913 = vpop.xlane.xlu0 %912
        %v914 = vsel %vm901, %v713, 0.0
        %915 = vadd.xlane.f32.xlu0 %v914
        %v916 = vpop.xlane.xlu0 %915
        %v917 = vsel %vm901, %v714, 0.0
        %918 = vadd.xlane.f32.xlu0 %v917
        %v919 = vpop.xlane.xlu0 %918
        %v920 = vsel %vm901, %v715, 0.0
        %921 = vadd.xlane.f32.xlu0 %v920
        %v922 = vpop.xlane.xlu0 %921
        %v923 = vsel %vm901, %v716, 0.0
        %924 = vadd.xlane.f32.xlu0 %v923
        %v925 = vpop.xlane.xlu0 %924
        %v926 = vsel %vm901, %v717, 0.0
        %927 = vadd.xlane.f32.xlu0 %v926
        %v928 = vpop.xlane.xlu0 %927
        %v929 = vsel %vm901, %v718, 0.0
        %930 = vadd.xlane.f32.xlu0 %v929
        %v931 = vpop.xlane.xlu0 %930
        %v932 = vsel %vm901, %v719, 0.0
        %933 = vadd.xlane.f32.xlu0 %v932
        %v934 = vpop.xlane.xlu0 %933
        %v935 = vsel %vm901, %v720, 0.0
        %936 = vadd.xlane.f32.xlu0 %v935
        %v937 = vpop.xlane.xlu0 %936
        %v938 = vsel %vm901, %v721, 0.0
        %939 = vadd.xlane.f32.xlu0 %v938
        %v940 = vpop.xlane.xlu0 %939
        %v941 = vsel %vm901, %v722, 0.0
        %942 = vadd.xlane.f32.xlu0 %v941
        %v943 = vpop.xlane.xlu0 %942
        %v944 = vsel %vm901, %v723, 0.0
        %945 = vadd.xlane.f32.xlu0 %v944
        %v946 = vpop.xlane.xlu0 %945
        %v947 = vsel %vm901, %v724, 0.0
        %948 = vadd.xlane.f32.xlu0 %v947
        %v949 = vpop.xlane.xlu0 %948
        %v950 = vsel %vm901, %v725, 0.0
        %951 = vadd.xlane.f32.xlu0 %v950
        %v952 = vpop.xlane.xlu0 %951
        %v953 = vsel %vm901, %v726, 0.0
        %954 = vadd.xlane.f32.xlu0 %v953
        %v955 = vpop.xlane.xlu0 %954
        %v956 = vsel %vm901, %v727, 0.0
        %957 = vadd.xlane.f32.xlu0 %v956
        %v958 = vpop.xlane.xlu0 %957
        %v959 = vsel %vm901, %v728, 0.0
        %960 = vadd.xlane.f32.xlu0 %v959
        %v961 = vpop.xlane.xlu0 %960
        %v962 = vsel %vm901, %v729, 0.0
        %963 = vadd.xlane.f32.xlu0 %v962
        %v964 = vpop.xlane.xlu0 %963
        %v965 = vsel %vm901, %v730, 0.0
        %966 = vadd.xlane.f32.xlu0 %v965
        %v967 = vpop.xlane.xlu0 %966
        %v968 = vsel %vm901, %v731, 0.0
        %969 = vadd.xlane.f32.xlu0 %v968
        %v970 = vpop.xlane.xlu0 %969
        %v971 = vsel %vm901, %v732, 0.0
        %972 = vadd.xlane.f32.xlu0 %v971
        %v973 = vpop.xlane.xlu0 %972
        %v974 = vsel %vm901, %v733, 0.0
        %975 = vadd.xlane.f32.xlu0 %v974
        %v976 = vpop.xlane.xlu0 %975
        %v977 = vsel %vm901, %v734, 0.0
        %978 = vadd.xlane.f32.xlu0 %v977
        %v979 = vpop.xlane.xlu0 %978
        %v980 = vsel %vm901, %v735, 0.0
        %981 = vadd.xlane.f32.xlu0 %v980
        %v982 = vpop.xlane.xlu0 %981
        %v983 = vsel %vm901, %v736, 0.0
        %984 = vadd.xlane.f32.xlu0 %v983
        %v985 = vpop.xlane.xlu0 %984
        %v986 = vsel %vm901, %v737, 0.0
        %987 = vadd.xlane.f32.xlu0 %v986
        %v988 = vpop.xlane.xlu0 %987
        %v989 = vsel %vm901, %v738, 0.0
        %990 = vadd.xlane.f32.xlu0 %v989
        %v991 = vpop.xlane.xlu0 %990
        %v992 = vsel %vm901, %v739, 0.0
        %993 = vadd.xlane.f32.xlu0 %v992
        %v994 = vpop.xlane.xlu0 %993
        %v995 = vsel %vm901, %v740, 0.0
        %996 = vadd.xlane.f32.xlu0 %v995
        %v997 = vpop.xlane.xlu0 %996
        %v998 = vsel %vm901, %v741, 0.0
        %999 = vadd.xlane.f32.xlu0 %v998
        %v1000 = vpop.xlane.xlu0 %999
        %v1001 = vsel %vm901, %v742, 0.0
        %1002 = vadd.xlane.f32.xlu0 %v1001
        %v1003 = vpop.xlane.xlu0 %1002
        %v1004 = vsel %vm901, %v743, 0.0
        %1005 = vadd.xlane.f32.xlu0 %v1004
        %v1006 = vpop.xlane.xlu0 %1005
        %v1007 = vsel %vm901, %v744, 0.0
        %1008 = vadd.xlane.f32.xlu0 %v1007
        %v1009 = vpop.xlane.xlu0 %1008
        %v1010 = vsel %vm901, %v745, 0.0
        %1011 = vadd.xlane.f32.xlu0 %v1010
        %v1012 = vpop.xlane.xlu0 %1011
        %v1013 = vsel %vm901, %v746, 0.0
        %1014 = vadd.xlane.f32.xlu0 %v1013
        %v1015 = vpop.xlane.xlu0 %1014
        %v1016 = vsel %vm901, %v747, 0.0
        %1017 = vadd.xlane.f32.xlu0 %v1016
        %v1018 = vpop.xlane.xlu0 %1017
        %v1019 = vsel %vm901, %v748, 0.0
        %1020 = vadd.xlane.f32.xlu0 %v1019
        %v1021 = vpop.xlane.xlu0 %1020
        %v1022 = vsel %vm901, %v749, 0.0
        %1023 = vadd.xlane.f32.xlu0 %v1022
        %v1024 = vpop.xlane.xlu0 %1023
        %v1025 = vsel %vm901, %v750, 0.0
        %1026 = vadd.xlane.f32.xlu0 %v1025
        %v1027 = vpop.xlane.xlu0 %1026
        %v1028 = vsel %vm901, %v751, 0.0
        %1029 = vadd.xlane.f32.xlu0 %v1028
        %v1030 = vpop.xlane.xlu0 %1029
        %v1031 = vsel %vm901, %v752, 0.0
        %1032 = vadd.xlane.f32.xlu0 %v1031
        %v1033 = vpop.xlane.xlu0 %1032
        %v1034 = vsel %vm901, %v753, 0.0
        %1035 = vadd.xlane.f32.xlu0 %v1034
        %v1036 = vpop.xlane.xlu0 %1035
        %v1037 = vsel %vm901, %v754, 0.0
        %1038 = vadd.xlane.f32.xlu0 %v1037
        %v1039 = vpop.xlane.xlu0 %1038
        %v1040 = vsel %vm901, %v755, 0.0
        %1041 = vadd.xlane.f32.xlu0 %v1040
        %v1042 = vpop.xlane.xlu0 %1041
        %v1043 = vsel %vm901, %v756, 0.0
        %1044 = vadd.xlane.f32.xlu0 %v1043
        %v1045 = vpop.xlane.xlu0 %1044
        %v1046 = vsel %vm901, %v757, 0.0
        %1047 = vadd.xlane.f32.xlu0 %v1046
        %v1048 = vpop.xlane.xlu0 %1047
        %v1049 = vsel %vm901, %v758, 0.0
        %1050 = vadd.xlane.f32.xlu0 %v1049
        %v1051 = vpop.xlane.xlu0 %1050
        %v1052 = vsel %vm901, %v759, 0.0
        %1053 = vadd.xlane.f32.xlu0 %v1052
        %v1054 = vpop.xlane.xlu0 %1053
        %v1055 = vsel %vm901, %v760, 0.0
        %1056 = vadd.xlane.f32.xlu0 %v1055
        %v1057 = vpop.xlane.xlu0 %1056
        %v1058 = vsel %vm901, %v761, 0.0
        %1059 = vadd.xlane.f32.xlu0 %v1058
        %v1060 = vpop.xlane.xlu0 %1059
        %v1061 = vsel %vm901, %v762, 0.0
        %1062 = vadd.xlane.f32.xlu0 %v1061
        %v1063 = vpop.xlane.xlu0 %1062
        %v1064 = vsel %vm901, %v763, 0.0
        %1065 = vadd.xlane.f32.xlu0 %v1064
        %v1066 = vpop.xlane.xlu0 %1065
        %v1067 = vsel %vm901, %v764, 0.0
        %1068 = vadd.xlane.f32.xlu0 %v1067
        %v1069 = vpop.xlane.xlu0 %1068
        %v1070 = vsel %vm901, %v765, 0.0
        %1071 = vadd.xlane.f32.xlu0 %v1070
        %v1072 = vpop.xlane.xlu0 %1071
        %v1073 = vsel %vm901, %v766, 0.0
        %1074 = vadd.xlane.f32.xlu0 %v1073
        %v1075 = vpop.xlane.xlu0 %1074
        %v1076 = vsel %vm901, %v767, 0.0
        %1077 = vadd.xlane.f32.xlu0 %v1076
        %v1078 = vpop.xlane.xlu0 %1077
        %v1079 = vsel %vm901, %v768, 0.0
        %1080 = vadd.xlane.f32.xlu0 %v1079
        %v1081 = vpop.xlane.xlu0 %1080
        %v1082 = vsel %vm901, %v769, 0.0
        %1083 = vadd.xlane.f32.xlu0 %v1082
        %v1084 = vpop.xlane.xlu0 %1083
        %v1085 = vsel %vm901, %v770, 0.0
        %1086 = vadd.xlane.f32.xlu0 %v1085
        %v1087 = vpop.xlane.xlu0 %1086
        %v1088 = vsel %vm901, %v771, 0.0
        %1089 = vadd.xlane.f32.xlu0 %v1088
        %v1090 = vpop.xlane.xlu0 %1089
        %v1091 = vsel %vm901, %v772, 0.0
        %1092 = vadd.xlane.f32.xlu0 %v1091
        %v1093 = vpop.xlane.xlu0 %1092
        %v1094 = vsel %vm901, %v773, 0.0
        %1095 = vadd.xlane.f32.xlu0 %v1094
        %v1096 = vpop.xlane.xlu0 %1095
        %v1097 = vsel %vm901, %v774, 0.0
        %1098 = vadd.xlane.f32.xlu0 %v1097
        %v1099 = vpop.xlane.xlu0 %1098
        %v1100 = vsel %vm901, %v775, 0.0
        %1101 = vadd.xlane.f32.xlu0 %v1100
        %v1102 = vpop.xlane.xlu0 %1101
        %v1103 = vsel %vm901, %v776, 0.0
        %1104 = vadd.xlane.f32.xlu0 %v1103
        %v1105 = vpop.xlane.xlu0 %1104
        %v1106 = vsel %vm901, %v777, 0.0
        %1107 = vadd.xlane.f32.xlu0 %v1106
        %v1108 = vpop.xlane.xlu0 %1107
        %v1109 = vsel %vm901, %v778, 0.0
        %1110 = vadd.xlane.f32.xlu0 %v1109
        %v1111 = vpop.xlane.xlu0 %1110
        %v1112 = vsel %vm901, %v779, 0.0
        %1113 = vadd.xlane.f32.xlu0 %v1112
        %v1114 = vpop.xlane.xlu0 %1113
        %v1115 = vsel %vm901, %v780, 0.0
        %1116 = vadd.xlane.f32.xlu0 %v1115
        %v1117 = vpop.xlane.xlu0 %1116
        %v1118 = vsel %vm901, %v781, 0.0
        %1119 = vadd.xlane.f32.xlu0 %v1118
        %v1120 = vpop.xlane.xlu0 %1119
        %v1121 = vsel %vm901, %v782, 0.0
        %1122 = vadd.xlane.f32.xlu0 %v1121
        %v1123 = vpop.xlane.xlu0 %1122
        %v1124 = vsel %vm901, %v783, 0.0
        %1125 = vadd.xlane.f32.xlu0 %v1124
        %v1126 = vpop.xlane.xlu0 %1125
        %v1127 = vsel %vm901, %v784, 0.0
        %1128 = vadd.xlane.f32.xlu0 %v1127
        %v1129 = vpop.xlane.xlu0 %1128
        %v1130 = vsel %vm901, %v785, 0.0
        %1131 = vadd.xlane.f32.xlu0 %v1130
        %v1132 = vpop.xlane.xlu0 %1131
        %v1133 = vsel %vm901, %v786, 0.0
        %1134 = vadd.xlane.f32.xlu0 %v1133
        %v1135 = vpop.xlane.xlu0 %1134
        %v1136 = vsel %vm901, %v787, 0.0
        %1137 = vadd.xlane.f32.xlu0 %v1136
        %v1138 = vpop.xlane.xlu0 %1137
        %v1139 = vsel %vm901, %v788, 0.0
        %1140 = vadd.xlane.f32.xlu0 %v1139
        %v1141 = vpop.xlane.xlu0 %1140
        %v1142 = vsel %vm901, %v789, 0.0
        %1143 = vadd.xlane.f32.xlu0 %v1142
        %v1144 = vpop.xlane.xlu0 %1143
        %v1145 = vsel %vm901, %v790, 0.0
        %1146 = vadd.xlane.f32.xlu0 %v1145
        %v1147 = vpop.xlane.xlu0 %1146
        %v1148 = vsel %vm901, %v791, 0.0
        %1149 = vadd.xlane.f32.xlu0 %v1148
        %v1150 = vpop.xlane.xlu0 %1149
        %v1151 = vsel %vm901, %v792, 0.0
        %1152 = vadd.xlane.f32.xlu0 %v1151
        %v1153 = vpop.xlane.xlu0 %1152
        %v1154 = vsel %vm901, %v793, 0.0
        %1155 = vadd.xlane.f32.xlu0 %v1154
        %v1156 = vpop.xlane.xlu0 %1155
        %v1157 = vsel %vm901, %v794, 0.0
        %1158 = vadd.xlane.f32.xlu0 %v1157
        %v1159 = vpop.xlane.xlu0 %1158
        %v1160 = vsel %vm901, %v795, 0.0
        %1161 = vadd.xlane.f32.xlu0 %v1160
        %v1162 = vpop.xlane.xlu0 %1161
        %v1163 = vsel %vm901, %v796, 0.0
        %1164 = vadd.xlane.f32.xlu0 %v1163
        %v1165 = vpop.xlane.xlu0 %1164
        %v1166 = vsel %vm901, %v797, 0.0
        %1167 = vadd.xlane.f32.xlu0 %v1166
        %v1168 = vpop.xlane.xlu0 %1167
        %v1169 = vsel %vm901, %v798, 0.0
        %1170 = vadd.xlane.f32.xlu0 %v1169
        %v1171 = vpop.xlane.xlu0 %1170
        %v1172 = vsel %vm901, %v799, 0.0
        %1173 = vadd.xlane.f32.xlu0 %v1172
        %v1174 = vpop.xlane.xlu0 %1173
        %v1175 = vsel %vm901, %v800, 0.0
        %1176 = vadd.xlane.f32.xlu0 %v1175
        %v1177 = vpop.xlane.xlu0 %1176
        %v1178 = vsel %vm901, %v801, 0.0
        %1179 = vadd.xlane.f32.xlu0 %v1178
        %v1180 = vpop.xlane.xlu0 %1179
        %v1181 = vsel %vm901, %v802, 0.0
        %1182 = vadd.xlane.f32.xlu0 %v1181
        %v1183 = vpop.xlane.xlu0 %1182
        %v1184 = vsel %vm901, %v803, 0.0
        %1185 = vadd.xlane.f32.xlu0 %v1184
        %v1186 = vpop.xlane.xlu0 %1185
        %v1187 = vsel %vm901, %v804, 0.0
        %1188 = vadd.xlane.f32.xlu0 %v1187
        %v1189 = vpop.xlane.xlu0 %1188
        %v1190 = vsel %vm901, %v805, 0.0
        %1191 = vadd.xlane.f32.xlu0 %v1190
        %v1192 = vpop.xlane.xlu0 %1191
        %v1193 = vsel %vm901, %v806, 0.0
        %1194 = vadd.xlane.f32.xlu0 %v1193
        %v1195 = vpop.xlane.xlu0 %1194
        %v1196 = vsel %vm901, %v807, 0.0
        %1197 = vadd.xlane.f32.xlu0 %v1196
        %v1198 = vpop.xlane.xlu0 %1197
        %v1199 = vsel %vm901, %v808, 0.0
        %1200 = vadd.xlane.f32.xlu0 %v1199
        %v1201 = vpop.xlane.xlu0 %1200
        %v1202 = vsel %vm901, %v809, 0.0
        %1203 = vadd.xlane.f32.xlu0 %v1202
        %v1204 = vpop.xlane.xlu0 %1203
        %v1205 = vsel %vm901, %v810, 0.0
        %1206 = vadd.xlane.f32.xlu0 %v1205
        %v1207 = vpop.xlane.xlu0 %1206
        %v1208 = vsel %vm901, %v811, 0.0
        %1209 = vadd.xlane.f32.xlu0 %v1208
        %v1210 = vpop.xlane.xlu0 %1209
        %v1211 = vsel %vm901, %v812, 0.0
        %1212 = vadd.xlane.f32.xlu0 %v1211
        %v1213 = vpop.xlane.xlu0 %1212
        %v1214 = vsel %vm901, %v813, 0.0
        %1215 = vadd.xlane.f32.xlu0 %v1214
        %v1216 = vpop.xlane.xlu0 %1215
        %v1217 = vsel %vm901, %v814, 0.0
        %1218 = vadd.xlane.f32.xlu0 %v1217
        %v1219 = vpop.xlane.xlu0 %1218
        %v1220 = vsel %vm901, %v815, 0.0
        %1221 = vadd.xlane.f32.xlu0 %v1220
        %v1222 = vpop.xlane.xlu0 %1221
        %v1223 = vsel %vm901, %v816, 0.0
        %1224 = vadd.xlane.f32.xlu0 %v1223
        %v1225 = vpop.xlane.xlu0 %1224
        %v1226 = vsel %vm901, %v817, 0.0
        %1227 = vadd.xlane.f32.xlu0 %v1226
        %v1228 = vpop.xlane.xlu0 %1227
        %v1229 = vsel %vm901, %v818, 0.0
        %1230 = vadd.xlane.f32.xlu0 %v1229
        %v1231 = vpop.xlane.xlu0 %1230
        %v1232 = vsel %vm901, %v819, 0.0
        %1233 = vadd.xlane.f32.xlu0 %v1232
        %v1234 = vpop.xlane.xlu0 %1233
        %v1235 = vsel %vm901, %v820, 0.0
        %1236 = vadd.xlane.f32.xlu0 %v1235
        %v1237 = vpop.xlane.xlu0 %1236
        %v1238 = vsel %vm901, %v821, 0.0
        %1239 = vadd.xlane.f32.xlu0 %v1238
        %v1240 = vpop.xlane.xlu0 %1239
        %v1241 = vsel %vm901, %v822, 0.0
        %1242 = vadd.xlane.f32.xlu0 %v1241
        %v1243 = vpop.xlane.xlu0 %1242
        %v1244 = vsel %vm901, %v823, 0.0
        %1245 = vadd.xlane.f32.xlu0 %v1244
        %v1246 = vpop.xlane.xlu0 %1245
        %v1247 = vsel %vm901, %v824, 0.0
        %1248 = vadd.xlane.f32.xlu0 %v1247
        %v1249 = vpop.xlane.xlu0 %1248
        %v1250 = vsel %vm901, %v825, 0.0
        %1251 = vadd.xlane.f32.xlu0 %v1250
        %v1252 = vpop.xlane.xlu0 %1251
        %v1253 = vsel %vm901, %v826, 0.0
        %1254 = vadd.xlane.f32.xlu0 %v1253
        %v1255 = vpop.xlane.xlu0 %1254
        %v1256 = vsel %vm901, %v827, 0.0
        %1257 = vadd.xlane.f32.xlu0 %v1256
        %v1258 = vpop.xlane.xlu0 %1257
        %v1259 = vsel %vm901, %v828, 0.0
        %1260 = vadd.xlane.f32.xlu0 %v1259
        %v1261 = vpop.xlane.xlu0 %1260
        %v1262 = vsel %vm901, %v829, 0.0
        %1263 = vadd.xlane.f32.xlu0 %v1262
        %v1264 = vpop.xlane.xlu0 %1263
        %v1265 = vsel %vm901, %v830, 0.0
        %1266 = vadd.xlane.f32.xlu0 %v1265
        %v1267 = vpop.xlane.xlu0 %1266
        %v1268 = vsel %vm901, %v831, 0.0
        %1269 = vadd.xlane.f32.xlu0 %v1268
        %v1270 = vpop.xlane.xlu0 %1269
        %v1271 = vsel %vm901, %v832, 0.0
        %1272 = vadd.xlane.f32.xlu0 %v1271
        %v1273 = vpop.xlane.xlu0 %1272
        %v1274 = vsel %vm901, %v833, 0.0
        %1275 = vadd.xlane.f32.xlu0 %v1274
        %v1276 = vpop.xlane.xlu0 %1275
        %v1277 = vsel %vm901, %v834, 0.0
        %1278 = vadd.xlane.f32.xlu0 %v1277
        %v1279 = vpop.xlane.xlu0 %1278
        %v1280 = vsel %vm901, %v835, 0.0
        %1281 = vadd.xlane.f32.xlu0 %v1280
        %v1282 = vpop.xlane.xlu0 %1281
        %v1283 = vsel %vm901, %v836, 0.0
        %1284 = vadd.xlane.f32.xlu0 %v1283
        %v1285 = vpop.xlane.xlu0 %1284
        %v1286 = vsel %vm901, %v837, 0.0
        %1287 = vadd.xlane.f32.xlu0 %v1286
        %v1288 = vpop.xlane.xlu0 %1287
        %v1289 = vsel %vm901, %v838, 0.0
        %1290 = vadd.xlane.f32.xlu0 %v1289
        %v1291 = vpop.xlane.xlu0 %1290
        %v1292 = vsel %vm901, %v839, 0.0
        %1293 = vadd.xlane.f32.xlu0 %v1292
        %v1294 = vpop.xlane.xlu0 %1293
        %v1295 = vsel %vm901, %v840, 0.0
        %1296 = vadd.xlane.f32.xlu0 %v1295
        %v1297 = vpop.xlane.xlu0 %1296
        %v1298 = vsel %vm901, %v841, 0.0
        %1299 = vadd.xlane.f32.xlu0 %v1298
        %v1300 = vpop.xlane.xlu0 %1299
        %v1301 = vsel %vm901, %v842, 0.0
        %1302 = vadd.xlane.f32.xlu0 %v1301
        %v1303 = vpop.xlane.xlu0 %1302
        %v1304 = vsel %vm901, %v843, 0.0
        %1305 = vadd.xlane.f32.xlu0 %v1304
        %v1306 = vpop.xlane.xlu0 %1305
        %v1307 = vsel %vm901, %v844, 0.0
        %1308 = vadd.xlane.f32.xlu0 %v1307
        %v1309 = vpop.xlane.xlu0 %1308
        %v1310 = vsel %vm901, %v845, 0.0
        %1311 = vadd.xlane.f32.xlu0 %v1310
        %v1312 = vpop.xlane.xlu0 %1311
        %v1313 = vsel %vm901, %v846, 0.0
        %1314 = vadd.xlane.f32.xlu0 %v1313
        %v1315 = vpop.xlane.xlu0 %1314
        %v1316 = vsel %vm901, %v847, 0.0
        %1317 = vadd.xlane.f32.xlu0 %v1316
        %v1318 = vpop.xlane.xlu0 %1317
        %v1319 = vsel %vm901, %v848, 0.0
        %1320 = vadd.xlane.f32.xlu0 %v1319
        %v1321 = vpop.xlane.xlu0 %1320
        %v1322 = vsel %vm901, %v849, 0.0
        %1323 = vadd.xlane.f32.xlu0 %v1322
        %v1324 = vpop.xlane.xlu0 %1323
        %v1325 = vsel %vm901, %v850, 0.0
        %1326 = vadd.xlane.f32.xlu0 %v1325
        %v1327 = vpop.xlane.xlu0 %1326
        %v1328 = vsel %vm901, %v851, 0.0
        %1329 = vadd.xlane.f32.xlu0 %v1328
        %v1330 = vpop.xlane.xlu0 %1329
        %v1331 = vsel %vm901, %v852, 0.0
        %1332 = vadd.xlane.f32.xlu0 %v1331
        %v1333 = vpop.xlane.xlu0 %1332
        %v1334 = vsel %vm901, %v853, 0.0
        %1335 = vadd.xlane.f32.xlu0 %v1334
        %v1336 = vpop.xlane.xlu0 %1335
        %v1337 = vsel %vm901, %v854, 0.0
        %1338 = vadd.xlane.f32.xlu0 %v1337
        %v1339 = vpop.xlane.xlu0 %1338
        %v1340 = vsel %vm901, %v855, 0.0
        %1341 = vadd.xlane.f32.xlu0 %v1340
        %v1342 = vpop.xlane.xlu0 %1341
        %v1343 = vsel %vm901, %v856, 0.0
        %1344 = vadd.xlane.f32.xlu0 %v1343
        %v1345 = vpop.xlane.xlu0 %1344
        %v1346 = vsel %vm901, %v857, 0.0
        %1347 = vadd.xlane.f32.xlu0 %v1346
        %v1348 = vpop.xlane.xlu0 %1347
        %v1349 = vsel %vm901, %v858, 0.0
        %1350 = vadd.xlane.f32.xlu0 %v1349
        %v1351 = vpop.xlane.xlu0 %1350
        %v1352 = vsel %vm901, %v859, 0.0
        %1353 = vadd.xlane.f32.xlu0 %v1352
        %v1354 = vpop.xlane.xlu0 %1353
        %v1355 = vsel %vm901, %v860, 0.0
        %1356 = vadd.xlane.f32.xlu0 %v1355
        %v1357 = vpop.xlane.xlu0 %1356
        %v1358 = vsel %vm901, %v861, 0.0
        %1359 = vadd.xlane.f32.xlu0 %v1358
        %v1360 = vpop.xlane.xlu0 %1359
        %v1361 = vsel %vm901, %v862, 0.0
        %1362 = vadd.xlane.f32.xlu0 %v1361
        %v1363 = vpop.xlane.xlu0 %1362
        %v1364 = vsel %vm901, %v863, 0.0
        %1365 = vadd.xlane.f32.xlu0 %v1364
        %v1366 = vpop.xlane.xlu0 %1365
        %v1367 = vsel %vm901, %v864, 0.0
        %1368 = vadd.xlane.f32.xlu0 %v1367
        %v1369 = vpop.xlane.xlu0 %1368
        %v1370 = vsel %vm901, %v865, 0.0
        %1371 = vadd.xlane.f32.xlu0 %v1370
        %v1372 = vpop.xlane.xlu0 %1371
        %v1373 = vsel %vm901, %v866, 0.0
        %1374 = vadd.xlane.f32.xlu0 %v1373
        %v1375 = vpop.xlane.xlu0 %1374
        %v1376 = vsel %vm901, %v867, 0.0
        %1377 = vadd.xlane.f32.xlu0 %v1376
        %v1378 = vpop.xlane.xlu0 %1377
        %v1379 = vsel %vm901, %v868, 0.0
        %1380 = vadd.xlane.f32.xlu0 %v1379
        %v1381 = vpop.xlane.xlu0 %1380
        %v1382 = vsel %vm901, %v869, 0.0
        %1383 = vadd.xlane.f32.xlu0 %v1382
        %v1384 = vpop.xlane.xlu0 %1383
        %v1385 = vsel %vm901, %v870, 0.0
        %1386 = vadd.xlane.f32.xlu0 %v1385
        %v1387 = vpop.xlane.xlu0 %1386
        %v1388 = vsel %vm901, %v871, 0.0
        %1389 = vadd.xlane.f32.xlu0 %v1388
        %v1390 = vpop.xlane.xlu0 %1389
        %v1391 = vsel %vm901, %v872, 0.0
        %1392 = vadd.xlane.f32.xlu0 %v1391
        %v1393 = vpop.xlane.xlu0 %1392
        %v1394 = vsel %vm901, %v873, 0.0
        %1395 = vadd.xlane.f32.xlu0 %v1394
        %v1396 = vpop.xlane.xlu0 %1395
        %v1397 = vsel %vm901, %v874, 0.0
        %1398 = vadd.xlane.f32.xlu0 %v1397
        %v1399 = vpop.xlane.xlu0 %1398
        %v1400 = vsel %vm901, %v875, 0.0
        %1401 = vadd.xlane.f32.xlu0 %v1400
        %v1402 = vpop.xlane.xlu0 %1401
        %v1403 = vsel %vm901, %v876, 0.0
        %1404 = vadd.xlane.f32.xlu0 %v1403
        %v1405 = vpop.xlane.xlu0 %1404
        %v1406 = vsel %vm901, %v877, 0.0
        %1407 = vadd.xlane.f32.xlu0 %v1406
        %v1408 = vpop.xlane.xlu0 %1407
        %v1409 = vsel %vm901, %v878, 0.0
        %1410 = vadd.xlane.f32.xlu0 %v1409
        %v1411 = vpop.xlane.xlu0 %1410
        %v1412 = vsel %vm901, %v879, 0.0
        %1413 = vadd.xlane.f32.xlu0 %v1412
        %v1414 = vpop.xlane.xlu0 %1413
        %v1415 = vsel %vm901, %v880, 0.0
        %1416 = vadd.xlane.f32.xlu0 %v1415
        %v1417 = vpop.xlane.xlu0 %1416
        %v1418 = vsel %vm901, %v881, 0.0
        %1419 = vadd.xlane.f32.xlu0 %v1418
        %v1420 = vpop.xlane.xlu0 %1419
        %v1421 = vsel %vm901, %v882, 0.0
        %1422 = vadd.xlane.f32.xlu0 %v1421
        %v1423 = vpop.xlane.xlu0 %1422
        %v1424 = vsel %vm901, %v883, 0.0
        %1425 = vadd.xlane.f32.xlu0 %v1424
        %v1426 = vpop.xlane.xlu0 %1425
        %v1427 = vsel %vm901, %v884, 0.0
        %1428 = vadd.xlane.f32.xlu0 %v1427
        %v1429 = vpop.xlane.xlu0 %1428
        %v1430 = vsel %vm901, %v885, 0.0
        %1431 = vadd.xlane.f32.xlu0 %v1430
        %v1432 = vpop.xlane.xlu0 %1431
        %v1433 = vsel %vm901, %v886, 0.0
        %1434 = vadd.xlane.f32.xlu0 %v1433
        %v1435 = vpop.xlane.xlu0 %1434
        %v1436 = vsel %vm901, %v887, 0.0
        %1437 = vadd.xlane.f32.xlu0 %v1436
        %v1438 = vpop.xlane.xlu0 %1437
        %v1439 = vsel %vm901, %v888, 0.0
        %1440 = vadd.xlane.f32.xlu0 %v1439
        %v1441 = vpop.xlane.xlu0 %1440
        %v1442 = vsel %vm901, %v889, 0.0
        %1443 = vadd.xlane.f32.xlu0 %v1442
        %v1444 = vpop.xlane.xlu0 %1443
        %v1445 = vsel %vm901, %v890, 0.0
        %1446 = vadd.xlane.f32.xlu0 %v1445
        %v1447 = vpop.xlane.xlu0 %1446
        %v1448 = vsel %vm901, %v891, 0.0
        %1449 = vadd.xlane.f32.xlu0 %v1448
        %v1450 = vpop.xlane.xlu0 %1449
        %v1451 = vsel %vm901, %v892, 0.0
        %1452 = vadd.xlane.f32.xlu0 %v1451
        %v1453 = vpop.xlane.xlu0 %1452
        %v1454 = vsel %vm901, %v893, 0.0
        %1455 = vadd.xlane.f32.xlu0 %v1454
        %v1456 = vpop.xlane.xlu0 %1455
        %v1457 = vsel %vm901, %v894, 0.0
        %1458 = vadd.xlane.f32.xlu0 %v1457
        %v1459 = vpop.xlane.xlu0 %1458
        %v1460 = vsel %vm901, %v895, 0.0
        %1461 = vadd.xlane.f32.xlu0 %v1460
        %v1462 = vpop.xlane.xlu0 %1461
        %v1463 = vsel %vm901, %v896, 0.0
        %1464 = vadd.xlane.f32.xlu0 %v1463
        %v1465 = vpop.xlane.xlu0 %1464
        %v1466 = vsel %vm901, %v897, 0.0
        %1467 = vadd.xlane.f32.xlu0 %v1466
        %v1468 = vpop.xlane.xlu0 %1467
        %v1469 = vsel %vm901, %v898, 0.0
        %1470 = vadd.xlane.f32.xlu0 %v1469
        %v1471 = vpop.xlane.xlu0 %1470
        %v1472 = vsel %vm901, %v899, 0.0
        %1473 = vadd.xlane.f32.xlu0 %v1472
        %v1474 = vpop.xlane.xlu0 %1473
        %v1475 = vsel %vm901, %v900, 0.0
        %1476 = vadd.xlane.f32.xlu0 %v1475
        %v1477 = vpop.xlane.xlu0 %1476
        %v1478 = vld [vmem:[#allocation2] sm:$0xff]
        %v1479 = vld [vmem:[%s702] sm:$0xff]
        %v1480 = vld [vmem:[%s702 + $0x8] sm:$0xff]
        %v1481 = vld [vmem:[%s702 + $0x10] sm:$0xff]
        %v1482 = vld [vmem:[%s702 + $0x18] sm:$0xff]
        %v1483 = vld [vmem:[%s702 + $0x20] sm:$0xff]
        %v1484 = vld [vmem:[%s702 + $0x28] sm:$0xff]
        %v1485 = vld [vmem:[%s702 + $0x30] sm:$0xff]
        %v1486 = vld [vmem:[%s702 + $0x38] sm:$0xff]
        %v1487 = vld [vmem:[%s702 + $0x40] sm:$0xff]
        %v1488 = vld [vmem:[%s702 + $0x48] sm:$0xff]
        %v1489 = vld [vmem:[%s702 + $0x50] sm:$0xff]
        %v1490 = vld [vmem:[%s702 + $0x58] sm:$0xff]
        %v1491 = vld [vmem:[%s702 + $0x60] sm:$0xff]
        %v1492 = vld [vmem:[%s702 + $0x68] sm:$0xff]
        %v1493 = vld [vmem:[%s702 + $0x70] sm:$0xff]
        %v1494 = vld [vmem:[%s702 + $0x78] sm:$0xff]
        %v1495 = vld [vmem:[%s702 + $0x80] sm:$0xff]
        %v1496 = vld [vmem:[%s702 + $0x88] sm:$0xff]
        %v1497 = vld [vmem:[%s702 + $0x90] sm:$0xff]
        %v1498 = vld [vmem:[%s702 + $0x98] sm:$0xff]
        %v1499 = vld [vmem:[%s702 + $0xa0] sm:$0xff]
        %v1500 = vld [vmem:[%s702 + $0xa8] sm:$0xff]
        %v1501 = vld [vmem:[%s702 + $0xb0] sm:$0xff]
        %v1502 = vld [vmem:[%s702 + $0xb8] sm:$0xff]
        %v1695 = vlaneseq
        %v1696 = vand.u32 %v1695, 127
        %v1697 = vlaneseq
        %v1698 = vshrl.u32 %v1697, 7
        %v1699 = vsub.s32 %v1696, %v1698
        %v1700 = vrot.slane %v904, %v1699
        %v1701 = vadd.s32 %v1696, 4294967288
        %v1702 = vlaneseq
        %v1703 = vshrl.u32 %v1702, 7
        %v1704 = vsub.s32 %v1701, %v1703
        %v1705 = vrot.slane %v907, %v1704
        %vm1706 = vcmask 130112
        %v1707 = vsel %vm1706, %v1705, %v1700
        %v1708 = vadd.s32 %v1696, 4294967280
        %v1709 = vlaneseq
        %v1710 = vshrl.u32 %v1709, 7
        %v1711 = vsub.s32 %v1708, %v1710
        %v1712 = vrot.slane %v910, %v1711
        %vm1713 = vcmask 195712
        %v1714 = vsel %vm1713, %v1712, %v1707
        %v1715 = vadd.s32 %v1696, 4294967272
        %v1716 = vlaneseq
        %v1717 = vshrl.u32 %v1716, 7
        %v1718 = vsub.s32 %v1715, %v1717
        %v1719 = vrot.slane %v913, %v1718
        %vm1720 = vcmask 261312
        %v1721 = vsel %vm1720, %v1719, %v1714
        %v1722 = vadd.s32 %v1696, 4294967264
        %v1723 = vlaneseq
        %v1724 = vshrl.u32 %v1723, 7
        %v1725 = vsub.s32 %v1722, %v1724
        %v1726 = vrot.slane %v916, %v1725
        %vm1727 = vcmask 326912
        %v1728 = vsel %vm1727, %v1726, %v1721
        %v1729 = vadd.s32 %v1696, 4294967256
        %v1730 = vlaneseq
        %v1731 = vshrl.u32 %v1730, 7
        %v1732 = vsub.s32 %v1729, %v1731
        %v1733 = vrot.slane %v919, %v1732
        %vm1734 = vcmask 392512
        %v1735 = vsel %vm1734, %v1733, %v1728
        %v1736 = vadd.s32 %v1696, 4294967248
        %v1737 = vlaneseq
        %v1738 = vshrl.u32 %v1737, 7
        %v1739 = vsub.s32 %v1736, %v1738
        %v1740 = vrot.slane %v922, %v1739
        %vm1741 = vcmask 458112
        %v1742 = vsel %vm1741, %v1740, %v1735
        %v1743 = vadd.s32 %v1696, 4294967240
        %v1744 = vlaneseq
        %v1745 = vshrl.u32 %v1744, 7
        %v1746 = vsub.s32 %v1743, %v1745
        %v1747 = vrot.slane %v925, %v1746
        %vm1748 = vcmask 523712
        %v1749 = vsel %vm1748, %v1747, %v1742
        %v1750 = vadd.s32 %v1696, 4294967232
        %v1751 = vlaneseq
        %v1752 = vshrl.u32 %v1751, 7
        %v1753 = vsub.s32 %v1750, %v1752
        %v1754 = vrot.slane %v928, %v1753
        %vm1755 = vcmask 589312
        %v1756 = vsel %vm1755, %v1754, %v1749
        %v1757 = vadd.s32 %v1696, 4294967224
        %v1758 = vlaneseq
        %v1759 = vshrl.u32 %v1758, 7
        %v1760 = vsub.s32 %v1757, %v1759
        %v1761 = vrot.slane %v931, %v1760
        %vm1762 = vcmask 654912
        %v1763 = vsel %vm1762, %v1761, %v1756
        %v1764 = vadd.s32 %v1696, 4294967216
        %v1765 = vlaneseq
        %v1766 = vshrl.u32 %v1765, 7
        %v1767 = vsub.s32 %v1764, %v1766
        %v1768 = vrot.slane %v934, %v1767
        %vm1769 = vcmask 720512
        %v1770 = vsel %vm1769, %v1768, %v1763
        %v1771 = vadd.s32 %v1696, 4294967208
        %v1772 = vlaneseq
        %v1773 = vshrl.u32 %v1772, 7
        %v1774 = vsub.s32 %v1771, %v1773
        %v1775 = vrot.slane %v937, %v1774
        %vm1776 = vcmask 786112
        %v1777 = vsel %vm1776, %v1775, %v1770
        %v1778 = vadd.s32 %v1696, 4294967200
        %v1779 = vlaneseq
        %v1780 = vshrl.u32 %v1779, 7
        %v1781 = vsub.s32 %v1778, %v1780
        %v1782 = vrot.slane %v940, %v1781
        %vm1783 = vcmask 851712
        %v1784 = vsel %vm1783, %v1782, %v1777
        %v1785 = vadd.s32 %v1696, 4294967192
        %v1786 = vlaneseq
        %v1787 = vshrl.u32 %v1786, 7
        %v1788 = vsub.s32 %v1785, %v1787
        %v1789 = vrot.slane %v943, %v1788
        %vm1790 = vcmask 917312
        %v1791 = vsel %vm1790, %v1789, %v1784
        %v1792 = vadd.s32 %v1696, 4294967184
        %v1793 = vlaneseq
        %v1794 = vshrl.u32 %v1793, 7
        %v1795 = vsub.s32 %v1792, %v1794
        %v1796 = vrot.slane %v946, %v1795
        %vm1797 = vcmask 982912
        %v1798 = vsel %vm1797, %v1796, %v1791
        %v1799 = vadd.s32 %v1696, 4294967176
        %v1800 = vlaneseq
        %v1801 = vshrl.u32 %v1800, 7
        %v1802 = vsub.s32 %v1799, %v1801
        %v1803 = vrot.slane %v949, %v1802
        %vm1804 = vcmask 1048512
        %v1805 = vsel %vm1804, %v1803, %v1798
        %v1806 = vlaneseq
        %v1807 = vshrl.u32 %v1806, 7
        %v1808 = vsub.s32 %v1696, %v1807
        %v1809 = vrot.slane %v952, %v1808
        %v1810 = vlaneseq
        %v1811 = vshrl.u32 %v1810, 7
        %v1812 = vsub.s32 %v1701, %v1811
        %v1813 = vrot.slane %v955, %v1812
        %v1814 = vsel %vm1706, %v1813, %v1809
        %v1815 = vlaneseq
        %v1816 = vshrl.u32 %v1815, 7
        %v1817 = vsub.s32 %v1708, %v1816
        %v1818 = vrot.slane %v958, %v1817
        %v1819 = vsel %vm1713, %v1818, %v1814
        %v1820 = vlaneseq
        %v1821 = vshrl.u32 %v1820, 7
        %v1822 = vsub.s32 %v1715, %v1821
        %v1823 = vrot.slane %v961, %v1822
        %v1824 = vsel %vm1720, %v1823, %v1819
        %v1825 = vlaneseq
        %v1826 = vshrl.u32 %v1825, 7
        %v1827 = vsub.s32 %v1722, %v1826
        %v1828 = vrot.slane %v964, %v1827
        %v1829 = vsel %vm1727, %v1828, %v1824
        %v1830 = vlaneseq
        %v1831 = vshrl.u32 %v1830, 7
        %v1832 = vsub.s32 %v1729, %v1831
        %v1833 = vrot.slane %v967, %v1832
        %v1834 = vsel %vm1734, %v1833, %v1829
        %v1835 = vlaneseq
        %v1836 = vshrl.u32 %v1835, 7
        %v1837 = vsub.s32 %v1736, %v1836
        %v1838 = vrot.slane %v970, %v1837
        %v1839 = vsel %vm1741, %v1838, %v1834
        %v1840 = vlaneseq
        %v1841 = vshrl.u32 %v1840, 7
        %v1842 = vsub.s32 %v1743, %v1841
        %v1843 = vrot.slane %v973, %v1842
        %v1844 = vsel %vm1748, %v1843, %v1839
        %v1845 = vlaneseq
        %v1846 = vshrl.u32 %v1845, 7
        %v1847 = vsub.s32 %v1696, %v1846
        %v1848 = vrot.slane %v976, %v1847
        %v1849 = vlaneseq
        %v1850 = vshrl.u32 %v1849, 7
        %v1851 = vsub.s32 %v1701, %v1850
        %v1852 = vrot.slane %v979, %v1851
        %v1853 = vsel %vm1706, %v1852, %v1848
        %v1854 = vlaneseq
        %v1855 = vshrl.u32 %v1854, 7
        %v1856 = vsub.s32 %v1708, %v1855
        %v1857 = vrot.slane %v982, %v1856
        %v1858 = vsel %vm1713, %v1857, %v1853
        %v1859 = vlaneseq
        %v1860 = vshrl.u32 %v1859, 7
        %v1861 = vsub.s32 %v1715, %v1860
        %v1862 = vrot.slane %v985, %v1861
        %v1863 = vsel %vm1720, %v1862, %v1858
        %v1864 = vlaneseq
        %v1865 = vshrl.u32 %v1864, 7
        %v1866 = vsub.s32 %v1722, %v1865
        %v1867 = vrot.slane %v988, %v1866
        %v1868 = vsel %vm1727, %v1867, %v1863
        %v1869 = vlaneseq
        %v1870 = vshrl.u32 %v1869, 7
        %v1871 = vsub.s32 %v1729, %v1870
        %v1872 = vrot.slane %v991, %v1871
        %v1873 = vsel %vm1734, %v1872, %v1868
        %v1874 = vlaneseq
        %v1875 = vshrl.u32 %v1874, 7
        %v1876 = vsub.s32 %v1736, %v1875
        %v1877 = vrot.slane %v994, %v1876
        %v1878 = vsel %vm1741, %v1877, %v1873
        %v1879 = vlaneseq
        %v1880 = vshrl.u32 %v1879, 7
        %v1881 = vsub.s32 %v1743, %v1880
        %v1882 = vrot.slane %v997, %v1881
        %v1883 = vsel %vm1748, %v1882, %v1878
        %v1884 = vlaneseq
        %v1885 = vshrl.u32 %v1884, 7
        %v1886 = vsub.s32 %v1750, %v1885
        %v1887 = vrot.slane %v1000, %v1886
        %v1888 = vsel %vm1755, %v1887, %v1883
        %v1889 = vlaneseq
        %v1890 = vshrl.u32 %v1889, 7
        %v1891 = vsub.s32 %v1757, %v1890
        %v1892 = vrot.slane %v1003, %v1891
        %v1893 = vsel %vm1762, %v1892, %v1888
        %v1894 = vlaneseq
        %v1895 = vshrl.u32 %v1894, 7
        %v1896 = vsub.s32 %v1764, %v1895
        %v1897 = vrot.slane %v1006, %v1896
        %v1898 = vsel %vm1769, %v1897, %v1893
        %v1899 = vlaneseq
        %v1900 = vshrl.u32 %v1899, 7
        %v1901 = vsub.s32 %v1771, %v1900
        %v1902 = vrot.slane %v1009, %v1901
        %v1903 = vsel %vm1776, %v1902, %v1898
        %v1904 = vlaneseq
        %v1905 = vshrl.u32 %v1904, 7
        %v1906 = vsub.s32 %v1778, %v1905
        %v1907 = vrot.slane %v1012, %v1906
        %v1908 = vsel %vm1783, %v1907, %v1903
        %v1909 = vlaneseq
        %v1910 = vshrl.u32 %v1909, 7
        %v1911 = vsub.s32 %v1785, %v1910
        %v1912 = vrot.slane %v1015, %v1911
        %v1913 = vsel %vm1790, %v1912, %v1908
        %v1914 = vlaneseq
        %v1915 = vshrl.u32 %v1914, 7
        %v1916 = vsub.s32 %v1792, %v1915
        %v1917 = vrot.slane %v1018, %v1916
        %v1918 = vsel %vm1797, %v1917, %v1913
        %v1919 = vlaneseq
        %v1920 = vshrl.u32 %v1919, 7
        %v1921 = vsub.s32 %v1799, %v1920
        %v1922 = vrot.slane %v1021, %v1921
        %v1923 = vsel %vm1804, %v1922, %v1918
        %v1924 = vlaneseq
        %v1925 = vshrl.u32 %v1924, 7
        %v1926 = vsub.s32 %v1696, %v1925
        %v1927 = vrot.slane %v1024, %v1926
        %v1928 = vlaneseq
        %v1929 = vshrl.u32 %v1928, 7
        %v1930 = vsub.s32 %v1701, %v1929
        %v1931 = vrot.slane %v1027, %v1930
        %v1932 = vsel %vm1706, %v1931, %v1927
        %v1933 = vlaneseq
        %v1934 = vshrl.u32 %v1933, 7
        %v1935 = vsub.s32 %v1708, %v1934
        %v1936 = vrot.slane %v1030, %v1935
        %v1937 = vsel %vm1713, %v1936, %v1932
        %v1938 = vlaneseq
        %v1939 = vshrl.u32 %v1938, 7
        %v1940 = vsub.s32 %v1715, %v1939
        %v1941 = vrot.slane %v1033, %v1940
        %v1942 = vsel %vm1720, %v1941, %v1937
        %v1943 = vlaneseq
        %v1944 = vshrl.u32 %v1943, 7
        %v1945 = vsub.s32 %v1722, %v1944
        %v1946 = vrot.slane %v1036, %v1945
        %v1947 = vsel %vm1727, %v1946, %v1942
        %v1948 = vlaneseq
        %v1949 = vshrl.u32 %v1948, 7
        %v1950 = vsub.s32 %v1729, %v1949
        %v1951 = vrot.slane %v1039, %v1950
        %v1952 = vsel %vm1734, %v1951, %v1947
        %v1953 = vlaneseq
        %v1954 = vshrl.u32 %v1953, 7
        %v1955 = vsub.s32 %v1736, %v1954
        %v1956 = vrot.slane %v1042, %v1955
        %v1957 = vsel %vm1741, %v1956, %v1952
        %v1958 = vlaneseq
        %v1959 = vshrl.u32 %v1958, 7
        %v1960 = vsub.s32 %v1743, %v1959
        %v1961 = vrot.slane %v1045, %v1960
        %v1962 = vsel %vm1748, %v1961, %v1957
        %v1963 = vlaneseq
        %v1964 = vshrl.u32 %v1963, 7
        %v1965 = vsub.s32 %v1696, %v1964
        %v1966 = vrot.slane %v1048, %v1965
        %v1967 = vlaneseq
        %v1968 = vshrl.u32 %v1967, 7
        %v1969 = vsub.s32 %v1701, %v1968
        %v1970 = vrot.slane %v1051, %v1969
        %v1971 = vsel %vm1706, %v1970, %v1966
        %v1972 = vlaneseq
        %v1973 = vshrl.u32 %v1972, 7
        %v1974 = vsub.s32 %v1708, %v1973
        %v1975 = vrot.slane %v1054, %v1974
        %v1976 = vsel %vm1713, %v1975, %v1971
        %v1977 = vlaneseq
        %v1978 = vshrl.u32 %v1977, 7
        %v1979 = vsub.s32 %v1715, %v1978
        %v1980 = vrot.slane %v1057, %v1979
        %v1981 = vsel %vm1720, %v1980, %v1976
        %v1982 = vlaneseq
        %v1983 = vshrl.u32 %v1982, 7
        %v1984 = vsub.s32 %v1722, %v1983
        %v1985 = vrot.slane %v1060, %v1984
        %v1986 = vsel %vm1727, %v1985, %v1981
        %v1987 = vlaneseq
        %v1988 = vshrl.u32 %v1987, 7
        %v1989 = vsub.s32 %v1729, %v1988
        %v1990 = vrot.slane %v1063, %v1989
        %v1991 = vsel %vm1734, %v1990, %v1986
        %v1992 = vlaneseq
        %v1993 = vshrl.u32 %v1992, 7
        %v1994 = vsub.s32 %v1736, %v1993
        %v1995 = vrot.slane %v1066, %v1994
        %v1996 = vsel %vm1741, %v1995, %v1991
        %v1997 = vlaneseq
        %v1998 = vshrl.u32 %v1997, 7
        %v1999 = vsub.s32 %v1743, %v1998
        %v2000 = vrot.slane %v1069, %v1999
        %v2001 = vsel %vm1748, %v2000, %v1996
        %v2002 = vlaneseq
        %v2003 = vshrl.u32 %v2002, 7
        %v2004 = vsub.s32 %v1750, %v2003
        %v2005 = vrot.slane %v1072, %v2004
        %v2006 = vsel %vm1755, %v2005, %v2001
        %v2007 = vlaneseq
        %v2008 = vshrl.u32 %v2007, 7
        %v2009 = vsub.s32 %v1757, %v2008
        %v2010 = vrot.slane %v1075, %v2009
        %v2011 = vsel %vm1762, %v2010, %v2006
        %v2012 = vlaneseq
        %v2013 = vshrl.u32 %v2012, 7
        %v2014 = vsub.s32 %v1764, %v2013
        %v2015 = vrot.slane %v1078, %v2014
        %v2016 = vsel %vm1769, %v2015, %v2011
        %v2017 = vlaneseq
        %v2018 = vshrl.u32 %v2017, 7
        %v2019 = vsub.s32 %v1771, %v2018
        %v2020 = vrot.slane %v1081, %v2019
        %v2021 = vsel %vm1776, %v2020, %v2016
        %v2022 = vlaneseq
        %v2023 = vshrl.u32 %v2022, 7
        %v2024 = vsub.s32 %v1778, %v2023
        %v2025 = vrot.slane %v1084, %v2024
        %v2026 = vsel %vm1783, %v2025, %v2021
        %v2027 = vlaneseq
        %v2028 = vshrl.u32 %v2027, 7
        %v2029 = vsub.s32 %v1785, %v2028
        %v2030 = vrot.slane %v1087, %v2029
        %v2031 = vsel %vm1790, %v2030, %v2026
        %v2032 = vlaneseq
        %v2033 = vshrl.u32 %v2032, 7
        %v2034 = vsub.s32 %v1792, %v2033
        %v2035 = vrot.slane %v1090, %v2034
        %v2036 = vsel %vm1797, %v2035, %v2031
        %v2037 = vlaneseq
        %v2038 = vshrl.u32 %v2037, 7
        %v2039 = vsub.s32 %v1799, %v2038
        %v2040 = vrot.slane %v1093, %v2039
        %v2041 = vsel %vm1804, %v2040, %v2036
        %v2042 = vlaneseq
        %v2043 = vshrl.u32 %v2042, 7
        %v2044 = vsub.s32 %v1696, %v2043
        %v2045 = vrot.slane %v1096, %v2044
        %v2046 = vlaneseq
        %v2047 = vshrl.u32 %v2046, 7
        %v2048 = vsub.s32 %v1701, %v2047
        %v2049 = vrot.slane %v1099, %v2048
        %v2050 = vsel %vm1706, %v2049, %v2045
        %v2051 = vlaneseq
        %v2052 = vshrl.u32 %v2051, 7
        %v2053 = vsub.s32 %v1708, %v2052
        %v2054 = vrot.slane %v1102, %v2053
        %v2055 = vsel %vm1713, %v2054, %v2050
        %v2056 = vlaneseq
        %v2057 = vshrl.u32 %v2056, 7
        %v2058 = vsub.s32 %v1715, %v2057
        %v2059 = vrot.slane %v1105, %v2058
        %v2060 = vsel %vm1720, %v2059, %v2055
        %v2061 = vlaneseq
        %v2062 = vshrl.u32 %v2061, 7
        %v2063 = vsub.s32 %v1722, %v2062
        %v2064 = vrot.slane %v1108, %v2063
        %v2065 = vsel %vm1727, %v2064, %v2060
        %v2066 = vlaneseq
        %v2067 = vshrl.u32 %v2066, 7
        %v2068 = vsub.s32 %v1729, %v2067
        %v2069 = vrot.slane %v1111, %v2068
        %v2070 = vsel %vm1734, %v2069, %v2065
        %v2071 = vlaneseq
        %v2072 = vshrl.u32 %v2071, 7
        %v2073 = vsub.s32 %v1736, %v2072
        %v2074 = vrot.slane %v1114, %v2073
        %v2075 = vsel %vm1741, %v2074, %v2070
        %v2076 = vlaneseq
        %v2077 = vshrl.u32 %v2076, 7
        %v2078 = vsub.s32 %v1743, %v2077
        %v2079 = vrot.slane %v1117, %v2078
        %v2080 = vsel %vm1748, %v2079, %v2075
        %v2081 = vlaneseq
        %v2082 = vshrl.u32 %v2081, 7
        %v2083 = vsub.s32 %v1696, %v2082
        %v2084 = vrot.slane %v1120, %v2083
        %v2085 = vlaneseq
        %v2086 = vshrl.u32 %v2085, 7
        %v2087 = vsub.s32 %v1701, %v2086
        %v2088 = vrot.slane %v1123, %v2087
        %v2089 = vsel %vm1706, %v2088, %v2084
        %v2090 = vlaneseq
        %v2091 = vshrl.u32 %v2090, 7
        %v2092 = vsub.s32 %v1708, %v2091
        %v2093 = vrot.slane %v1126, %v2092
        %v2094 = vsel %vm1713, %v2093, %v2089
        %v2095 = vlaneseq
        %v2096 = vshrl.u32 %v2095, 7
        %v2097 = vsub.s32 %v1715, %v2096
        %v2098 = vrot.slane %v1129, %v2097
        %v2099 = vsel %vm1720, %v2098, %v2094
        %v2100 = vlaneseq
        %v2101 = vshrl.u32 %v2100, 7
        %v2102 = vsub.s32 %v1722, %v2101
        %v2103 = vrot.slane %v1132, %v2102
        %v2104 = vsel %vm1727, %v2103, %v2099
        %v2105 = vlaneseq
        %v2106 = vshrl.u32 %v2105, 7
        %v2107 = vsub.s32 %v1729, %v2106
        %v2108 = vrot.slane %v1135, %v2107
        %v2109 = vsel %vm1734, %v2108, %v2104
        %v2110 = vlaneseq
        %v2111 = vshrl.u32 %v2110, 7
        %v2112 = vsub.s32 %v1736, %v2111
        %v2113 = vrot.slane %v1138, %v2112
        %v2114 = vsel %vm1741, %v2113, %v2109
        %v2115 = vlaneseq
        %v2116 = vshrl.u32 %v2115, 7
        %v2117 = vsub.s32 %v1743, %v2116
        %v2118 = vrot.slane %v1141, %v2117
        %v2119 = vsel %vm1748, %v2118, %v2114
        %v2120 = vlaneseq
        %v2121 = vshrl.u32 %v2120, 7
        %v2122 = vsub.s32 %v1750, %v2121
        %v2123 = vrot.slane %v1144, %v2122
        %v2124 = vsel %vm1755, %v2123, %v2119
        %v2125 = vlaneseq
        %v2126 = vshrl.u32 %v2125, 7
        %v2127 = vsub.s32 %v1757, %v2126
        %v2128 = vrot.slane %v1147, %v2127
        %v2129 = vsel %vm1762, %v2128, %v2124
        %v2130 = vlaneseq
        %v2131 = vshrl.u32 %v2130, 7
        %v2132 = vsub.s32 %v1764, %v2131
        %v2133 = vrot.slane %v1150, %v2132
        %v2134 = vsel %vm1769, %v2133, %v2129
        %v2135 = vlaneseq
        %v2136 = vshrl.u32 %v2135, 7
        %v2137 = vsub.s32 %v1771, %v2136
        %v2138 = vrot.slane %v1153, %v2137
        %v2139 = vsel %vm1776, %v2138, %v2134
        %v2140 = vlaneseq
        %v2141 = vshrl.u32 %v2140, 7
        %v2142 = vsub.s32 %v1778, %v2141
        %v2143 = vrot.slane %v1156, %v2142
        %v2144 = vsel %vm1783, %v2143, %v2139
        %v2145 = vlaneseq
        %v2146 = vshrl.u32 %v2145, 7
        %v2147 = vsub.s32 %v1785, %v2146
        %v2148 = vrot.slane %v1159, %v2147
        %v2149 = vsel %vm1790, %v2148, %v2144
        %v2150 = vlaneseq
        %v2151 = vshrl.u32 %v2150, 7
        %v2152 = vsub.s32 %v1792, %v2151
        %v2153 = vrot.slane %v1162, %v2152
        %v2154 = vsel %vm1797, %v2153, %v2149
        %v2155 = vlaneseq
        %v2156 = vshrl.u32 %v2155, 7
        %v2157 = vsub.s32 %v1799, %v2156
        %v2158 = vrot.slane %v1165, %v2157
        %v2159 = vsel %vm1804, %v2158, %v2154
        %v2160 = vlaneseq
        %v2161 = vshrl.u32 %v2160, 7
        %v2162 = vsub.s32 %v1696, %v2161
        %v2163 = vrot.slane %v1168, %v2162
        %v2164 = vlaneseq
        %v2165 = vshrl.u32 %v2164, 7
        %v2166 = vsub.s32 %v1701, %v2165
        %v2167 = vrot.slane %v1171, %v2166
        %v2168 = vsel %vm1706, %v2167, %v2163
        %v2169 = vlaneseq
        %v2170 = vshrl.u32 %v2169, 7
        %v2171 = vsub.s32 %v1708, %v2170
        %v2172 = vrot.slane %v1174, %v2171
        %v2173 = vsel %vm1713, %v2172, %v2168
        %v2174 = vlaneseq
        %v2175 = vshrl.u32 %v2174, 7
        %v2176 = vsub.s32 %v1715, %v2175
        %v2177 = vrot.slane %v1177, %v2176
        %v2178 = vsel %vm1720, %v2177, %v2173
        %v2179 = vlaneseq
        %v2180 = vshrl.u32 %v2179, 7
        %v2181 = vsub.s32 %v1722, %v2180
        %v2182 = vrot.slane %v1180, %v2181
        %v2183 = vsel %vm1727, %v2182, %v2178
        %v2184 = vlaneseq
        %v2185 = vshrl.u32 %v2184, 7
        %v2186 = vsub.s32 %v1729, %v2185
        %v2187 = vrot.slane %v1183, %v2186
        %v2188 = vsel %vm1734, %v2187, %v2183
        %v2189 = vlaneseq
        %v2190 = vshrl.u32 %v2189, 7
        %v2191 = vsub.s32 %v1736, %v2190
        %v2192 = vrot.slane %v1186, %v2191
        %v2193 = vsel %vm1741, %v2192, %v2188
        %v2194 = vlaneseq
        %v2195 = vshrl.u32 %v2194, 7
        %v2196 = vsub.s32 %v1743, %v2195
        %v2197 = vrot.slane %v1189, %v2196
        %v2198 = vsel %vm1748, %v2197, %v2193
        %v2199 = vlaneseq
        %v2200 = vshrl.u32 %v2199, 7
        %v2201 = vsub.s32 %v1696, %v2200
        %v2202 = vrot.slane %v1192, %v2201
        %v2203 = vlaneseq
        %v2204 = vshrl.u32 %v2203, 7
        %v2205 = vsub.s32 %v1701, %v2204
        %v2206 = vrot.slane %v1195, %v2205
        %v2207 = vsel %vm1706, %v2206, %v2202
        %v2208 = vlaneseq
        %v2209 = vshrl.u32 %v2208, 7
        %v2210 = vsub.s32 %v1708, %v2209
        %v2211 = vrot.slane %v1198, %v2210
        %v2212 = vsel %vm1713, %v2211, %v2207
        %v2213 = vlaneseq
        %v2214 = vshrl.u32 %v2213, 7
        %v2215 = vsub.s32 %v1715, %v2214
        %v2216 = vrot.slane %v1201, %v2215
        %v2217 = vsel %vm1720, %v2216, %v2212
        %v2218 = vlaneseq
        %v2219 = vshrl.u32 %v2218, 7
        %v2220 = vsub.s32 %v1722, %v2219
        %v2221 = vrot.slane %v1204, %v2220
        %v2222 = vsel %vm1727, %v2221, %v2217
        %v2223 = vlaneseq
        %v2224 = vshrl.u32 %v2223, 7
        %v2225 = vsub.s32 %v1729, %v2224
        %v2226 = vrot.slane %v1207, %v2225
        %v2227 = vsel %vm1734, %v2226, %v2222
        %v2228 = vlaneseq
        %v2229 = vshrl.u32 %v2228, 7
        %v2230 = vsub.s32 %v1736, %v2229
        %v2231 = vrot.slane %v1210, %v2230
        %v2232 = vsel %vm1741, %v2231, %v2227
        %v2233 = vlaneseq
        %v2234 = vshrl.u32 %v2233, 7
        %v2235 = vsub.s32 %v1743, %v2234
        %v2236 = vrot.slane %v1213, %v2235
        %v2237 = vsel %vm1748, %v2236, %v2232
        %v2238 = vlaneseq
        %v2239 = vshrl.u32 %v2238, 7
        %v2240 = vsub.s32 %v1750, %v2239
        %v2241 = vrot.slane %v1216, %v2240
        %v2242 = vsel %vm1755, %v2241, %v2237
        %v2243 = vlaneseq
        %v2244 = vshrl.u32 %v2243, 7
        %v2245 = vsub.s32 %v1757, %v2244
        %v2246 = vrot.slane %v1219, %v2245
        %v2247 = vsel %vm1762, %v2246, %v2242
        %v2248 = vlaneseq
        %v2249 = vshrl.u32 %v2248, 7
        %v2250 = vsub.s32 %v1764, %v2249
        %v2251 = vrot.slane %v1222, %v2250
        %v2252 = vsel %vm1769, %v2251, %v2247
        %v2253 = vlaneseq
        %v2254 = vshrl.u32 %v2253, 7
        %v2255 = vsub.s32 %v1771, %v2254
        %v2256 = vrot.slane %v1225, %v2255
        %v2257 = vsel %vm1776, %v2256, %v2252
        %v2258 = vlaneseq
        %v2259 = vshrl.u32 %v2258, 7
        %v2260 = vsub.s32 %v1778, %v2259
        %v2261 = vrot.slane %v1228, %v2260
        %v2262 = vsel %vm1783, %v2261, %v2257
        %v2263 = vlaneseq
        %v2264 = vshrl.u32 %v2263, 7
        %v2265 = vsub.s32 %v1785, %v2264
        %v2266 = vrot.slane %v1231, %v2265
        %v2267 = vsel %vm1790, %v2266, %v2262
        %v2268 = vlaneseq
        %v2269 = vshrl.u32 %v2268, 7
        %v2270 = vsub.s32 %v1792, %v2269
        %v2271 = vrot.slane %v1234, %v2270
        %v2272 = vsel %vm1797, %v2271, %v2267
        %v2273 = vlaneseq
        %v2274 = vshrl.u32 %v2273, 7
        %v2275 = vsub.s32 %v1799, %v2274
        %v2276 = vrot.slane %v1237, %v2275
        %v2277 = vsel %vm1804, %v2276, %v2272
        %v2278 = vlaneseq
        %v2279 = vshrl.u32 %v2278, 7
        %v2280 = vsub.s32 %v1696, %v2279
        %v2281 = vrot.slane %v1240, %v2280
        %v2282 = vlaneseq
        %v2283 = vshrl.u32 %v2282, 7
        %v2284 = vsub.s32 %v1701, %v2283
        %v2285 = vrot.slane %v1243, %v2284
        %v2286 = vsel %vm1706, %v2285, %v2281
        %v2287 = vlaneseq
        %v2288 = vshrl.u32 %v2287, 7
        %v2289 = vsub.s32 %v1708, %v2288
        %v2290 = vrot.slane %v1246, %v2289
        %v2291 = vsel %vm1713, %v2290, %v2286
        %v2292 = vlaneseq
        %v2293 = vshrl.u32 %v2292, 7
        %v2294 = vsub.s32 %v1715, %v2293
        %v2295 = vrot.slane %v1249, %v2294
        %v2296 = vsel %vm1720, %v2295, %v2291
        %v2297 = vlaneseq
        %v2298 = vshrl.u32 %v2297, 7
        %v2299 = vsub.s32 %v1722, %v2298
        %v2300 = vrot.slane %v1252, %v2299
        %v2301 = vsel %vm1727, %v2300, %v2296
        %v2302 = vlaneseq
        %v2303 = vshrl.u32 %v2302, 7
        %v2304 = vsub.s32 %v1729, %v2303
        %v2305 = vrot.slane %v1255, %v2304
        %v2306 = vsel %vm1734, %v2305, %v2301
        %v2307 = vlaneseq
        %v2308 = vshrl.u32 %v2307, 7
        %v2309 = vsub.s32 %v1736, %v2308
        %v2310 = vrot.slane %v1258, %v2309
        %v2311 = vsel %vm1741, %v2310, %v2306
        %v2312 = vlaneseq
        %v2313 = vshrl.u32 %v2312, 7
        %v2314 = vsub.s32 %v1743, %v2313
        %v2315 = vrot.slane %v1261, %v2314
        %v2316 = vsel %vm1748, %v2315, %v2311
        %v2317 = vlaneseq
        %v2318 = vshrl.u32 %v2317, 7
        %v2319 = vsub.s32 %v1696, %v2318
        %v2320 = vrot.slane %v1264, %v2319
        %v2321 = vlaneseq
        %v2322 = vshrl.u32 %v2321, 7
        %v2323 = vsub.s32 %v1701, %v2322
        %v2324 = vrot.slane %v1267, %v2323
        %v2325 = vsel %vm1706, %v2324, %v2320
        %v2326 = vlaneseq
        %v2327 = vshrl.u32 %v2326, 7
        %v2328 = vsub.s32 %v1708, %v2327
        %v2329 = vrot.slane %v1270, %v2328
        %v2330 = vsel %vm1713, %v2329, %v2325
        %v2331 = vlaneseq
        %v2332 = vshrl.u32 %v2331, 7
        %v2333 = vsub.s32 %v1715, %v2332
        %v2334 = vrot.slane %v1273, %v2333
        %v2335 = vsel %vm1720, %v2334, %v2330
        %v2336 = vlaneseq
        %v2337 = vshrl.u32 %v2336, 7
        %v2338 = vsub.s32 %v1722, %v2337
        %v2339 = vrot.slane %v1276, %v2338
        %v2340 = vsel %vm1727, %v2339, %v2335
        %v2341 = vlaneseq
        %v2342 = vshrl.u32 %v2341, 7
        %v2343 = vsub.s32 %v1729, %v2342
        %v2344 = vrot.slane %v1279, %v2343
        %v2345 = vsel %vm1734, %v2344, %v2340
        %v2346 = vlaneseq
        %v2347 = vshrl.u32 %v2346, 7
        %v2348 = vsub.s32 %v1736, %v2347
        %v2349 = vrot.slane %v1282, %v2348
        %v2350 = vsel %vm1741, %v2349, %v2345
        %v2351 = vlaneseq
        %v2352 = vshrl.u32 %v2351, 7
        %v2353 = vsub.s32 %v1743, %v2352
        %v2354 = vrot.slane %v1285, %v2353
        %v2355 = vsel %vm1748, %v2354, %v2350
        %v2356 = vlaneseq
        %v2357 = vshrl.u32 %v2356, 7
        %v2358 = vsub.s32 %v1750, %v2357
        %v2359 = vrot.slane %v1288, %v2358
        %v2360 = vsel %vm1755, %v2359, %v2355
        %v2361 = vlaneseq
        %v2362 = vshrl.u32 %v2361, 7
        %v2363 = vsub.s32 %v1757, %v2362
        %v2364 = vrot.slane %v1291, %v2363
        %v2365 = vsel %vm1762, %v2364, %v2360
        %v2366 = vlaneseq
        %v2367 = vshrl.u32 %v2366, 7
        %v2368 = vsub.s32 %v1764, %v2367
        %v2369 = vrot.slane %v1294, %v2368
        %v2370 = vsel %vm1769, %v2369, %v2365
        %v2371 = vlaneseq
        %v2372 = vshrl.u32 %v2371, 7
        %v2373 = vsub.s32 %v1771, %v2372
        %v2374 = vrot.slane %v1297, %v2373
        %v2375 = vsel %vm1776, %v2374, %v2370
        %v2376 = vlaneseq
        %v2377 = vshrl.u32 %v2376, 7
        %v2378 = vsub.s32 %v1778, %v2377
        %v2379 = vrot.slane %v1300, %v2378
        %v2380 = vsel %vm1783, %v2379, %v2375
        %v2381 = vlaneseq
        %v2382 = vshrl.u32 %v2381, 7
        %v2383 = vsub.s32 %v1785, %v2382
        %v2384 = vrot.slane %v1303, %v2383
        %v2385 = vsel %vm1790, %v2384, %v2380
        %v2386 = vlaneseq
        %v2387 = vshrl.u32 %v2386, 7
        %v2388 = vsub.s32 %v1792, %v2387
        %v2389 = vrot.slane %v1306, %v2388
        %v2390 = vsel %vm1797, %v2389, %v2385
        %v2391 = vlaneseq
        %v2392 = vshrl.u32 %v2391, 7
        %v2393 = vsub.s32 %v1799, %v2392
        %v2394 = vrot.slane %v1309, %v2393
        %v2395 = vsel %vm1804, %v2394, %v2390
        %v2396 = vlaneseq
        %v2397 = vshrl.u32 %v2396, 7
        %v2398 = vsub.s32 %v1696, %v2397
        %v2399 = vrot.slane %v1312, %v2398
        %v2400 = vlaneseq
        %v2401 = vshrl.u32 %v2400, 7
        %v2402 = vsub.s32 %v1701, %v2401
        %v2403 = vrot.slane %v1315, %v2402
        %v2404 = vsel %vm1706, %v2403, %v2399
        %v2405 = vlaneseq
        %v2406 = vshrl.u32 %v2405, 7
        %v2407 = vsub.s32 %v1708, %v2406
        %v2408 = vrot.slane %v1318, %v2407
        %v2409 = vsel %vm1713, %v2408, %v2404
        %v2410 = vlaneseq
        %v2411 = vshrl.u32 %v2410, 7
        %v2412 = vsub.s32 %v1715, %v2411
        %v2413 = vrot.slane %v1321, %v2412
        %v2414 = vsel %vm1720, %v2413, %v2409
        %v2415 = vlaneseq
        %v2416 = vshrl.u32 %v2415, 7
        %v2417 = vsub.s32 %v1722, %v2416
        %v2418 = vrot.slane %v1324, %v2417
        %v2419 = vsel %vm1727, %v2418, %v2414
        %v2420 = vlaneseq
        %v2421 = vshrl.u32 %v2420, 7
        %v2422 = vsub.s32 %v1729, %v2421
        %v2423 = vrot.slane %v1327, %v2422
        %v2424 = vsel %vm1734, %v2423, %v2419
        %v2425 = vlaneseq
        %v2426 = vshrl.u32 %v2425, 7
        %v2427 = vsub.s32 %v1736, %v2426
        %v2428 = vrot.slane %v1330, %v2427
        %v2429 = vsel %vm1741, %v2428, %v2424
        %v2430 = vlaneseq
        %v2431 = vshrl.u32 %v2430, 7
        %v2432 = vsub.s32 %v1743, %v2431
        %v2433 = vrot.slane %v1333, %v2432
        %v2434 = vsel %vm1748, %v2433, %v2429
        %v2435 = vlaneseq
        %v2436 = vshrl.u32 %v2435, 7
        %v2437 = vsub.s32 %v1696, %v2436
        %v2438 = vrot.slane %v1336, %v2437
        %v2439 = vlaneseq
        %v2440 = vshrl.u32 %v2439, 7
        %v2441 = vsub.s32 %v1701, %v2440
        %v2442 = vrot.slane %v1339, %v2441
        %v2443 = vsel %vm1706, %v2442, %v2438
        %v2444 = vlaneseq
        %v2445 = vshrl.u32 %v2444, 7
        %v2446 = vsub.s32 %v1708, %v2445
        %v2447 = vrot.slane %v1342, %v2446
        %v2448 = vsel %vm1713, %v2447, %v2443
        %v2449 = vlaneseq
        %v2450 = vshrl.u32 %v2449, 7
        %v2451 = vsub.s32 %v1715, %v2450
        %v2452 = vrot.slane %v1345, %v2451
        %v2453 = vsel %vm1720, %v2452, %v2448
        %v2454 = vlaneseq
        %v2455 = vshrl.u32 %v2454, 7
        %v2456 = vsub.s32 %v1722, %v2455
        %v2457 = vrot.slane %v1348, %v2456
        %v2458 = vsel %vm1727, %v2457, %v2453
        %v2459 = vlaneseq
        %v2460 = vshrl.u32 %v2459, 7
        %v2461 = vsub.s32 %v1729, %v2460
        %v2462 = vrot.slane %v1351, %v2461
        %v2463 = vsel %vm1734, %v2462, %v2458
        %v2464 = vlaneseq
        %v2465 = vshrl.u32 %v2464, 7
        %v2466 = vsub.s32 %v1736, %v2465
        %v2467 = vrot.slane %v1354, %v2466
        %v2468 = vsel %vm1741, %v2467, %v2463
        %v2469 = vlaneseq
        %v2470 = vshrl.u32 %v2469, 7
        %v2471 = vsub.s32 %v1743, %v2470
        %v2472 = vrot.slane %v1357, %v2471
        %v2473 = vsel %vm1748, %v2472, %v2468
        %v2474 = vlaneseq
        %v2475 = vshrl.u32 %v2474, 7
        %v2476 = vsub.s32 %v1750, %v2475
        %v2477 = vrot.slane %v1360, %v2476
        %v2478 = vsel %vm1755, %v2477, %v2473
        %v2479 = vlaneseq
        %v2480 = vshrl.u32 %v2479, 7
        %v2481 = vsub.s32 %v1757, %v2480
        %v2482 = vrot.slane %v1363, %v2481
        %v2483 = vsel %vm1762, %v2482, %v2478
        %v2484 = vlaneseq
        %v2485 = vshrl.u32 %v2484, 7
        %v2486 = vsub.s32 %v1764, %v2485
        %v2487 = vrot.slane %v1366, %v2486
        %v2488 = vsel %vm1769, %v2487, %v2483
        %v2489 = vlaneseq
        %v2490 = vshrl.u32 %v2489, 7
        %v2491 = vsub.s32 %v1771, %v2490
        %v2492 = vrot.slane %v1369, %v2491
        %v2493 = vsel %vm1776, %v2492, %v2488
        %v2494 = vlaneseq
        %v2495 = vshrl.u32 %v2494, 7
        %v2496 = vsub.s32 %v1778, %v2495
        %v2497 = vrot.slane %v1372, %v2496
        %v2498 = vsel %vm1783, %v2497, %v2493
        %v2499 = vlaneseq
        %v2500 = vshrl.u32 %v2499, 7
        %v2501 = vsub.s32 %v1785, %v2500
        %v2502 = vrot.slane %v1375, %v2501
        %v2503 = vsel %vm1790, %v2502, %v2498
        %v2504 = vlaneseq
        %v2505 = vshrl.u32 %v2504, 7
        %v2506 = vsub.s32 %v1792, %v2505
        %v2507 = vrot.slane %v1378, %v2506
        %v2508 = vsel %vm1797, %v2507, %v2503
        %v2509 = vlaneseq
        %v2510 = vshrl.u32 %v2509, 7
        %v2511 = vsub.s32 %v1799, %v2510
        %v2512 = vrot.slane %v1381, %v2511
        %v2513 = vsel %vm1804, %v2512, %v2508
        %v2514 = vlaneseq
        %v2515 = vshrl.u32 %v2514, 7
        %v2516 = vsub.s32 %v1696, %v2515
        %v2517 = vrot.slane %v1384, %v2516
        %v2518 = vlaneseq
        %v2519 = vshrl.u32 %v2518, 7
        %v2520 = vsub.s32 %v1701, %v2519
        %v2521 = vrot.slane %v1387, %v2520
        %v2522 = vsel %vm1706, %v2521, %v2517
        %v2523 = vlaneseq
        %v2524 = vshrl.u32 %v2523, 7
        %v2525 = vsub.s32 %v1708, %v2524
        %v2526 = vrot.slane %v1390, %v2525
        %v2527 = vsel %vm1713, %v2526, %v2522
        %v2528 = vlaneseq
        %v2529 = vshrl.u32 %v2528, 7
        %v2530 = vsub.s32 %v1715, %v2529
        %v2531 = vrot.slane %v1393, %v2530
        %v2532 = vsel %vm1720, %v2531, %v2527
        %v2533 = vlaneseq
        %v2534 = vshrl.u32 %v2533, 7
        %v2535 = vsub.s32 %v1722, %v2534
        %v2536 = vrot.slane %v1396, %v2535
        %v2537 = vsel %vm1727, %v2536, %v2532
        %v2538 = vlaneseq
        %v2539 = vshrl.u32 %v2538, 7
        %v2540 = vsub.s32 %v1729, %v2539
        %v2541 = vrot.slane %v1399, %v2540
        %v2542 = vsel %vm1734, %v2541, %v2537
        %v2543 = vlaneseq
        %v2544 = vshrl.u32 %v2543, 7
        %v2545 = vsub.s32 %v1736, %v2544
        %v2546 = vrot.slane %v1402, %v2545
        %v2547 = vsel %vm1741, %v2546, %v2542
        %v2548 = vlaneseq
        %v2549 = vshrl.u32 %v2548, 7
        %v2550 = vsub.s32 %v1743, %v2549
        %v2551 = vrot.slane %v1405, %v2550
        %v2552 = vsel %vm1748, %v2551, %v2547
        %v2553 = vlaneseq
        %v2554 = vshrl.u32 %v2553, 7
        %v2555 = vsub.s32 %v1696, %v2554
        %v2556 = vrot.slane %v1408, %v2555
        %v2557 = vlaneseq
        %v2558 = vshrl.u32 %v2557, 7
        %v2559 = vsub.s32 %v1701, %v2558
        %v2560 = vrot.slane %v1411, %v2559
        %v2561 = vsel %vm1706, %v2560, %v2556
        %v2562 = vlaneseq
        %v2563 = vshrl.u32 %v2562, 7
        %v2564 = vsub.s32 %v1708, %v2563
        %v2565 = vrot.slane %v1414, %v2564
        %v2566 = vsel %vm1713, %v2565, %v2561
        %v2567 = vlaneseq
        %v2568 = vshrl.u32 %v2567, 7
        %v2569 = vsub.s32 %v1715, %v2568
        %v2570 = vrot.slane %v1417, %v2569
        %v2571 = vsel %vm1720, %v2570, %v2566
        %v2572 = vlaneseq
        %v2573 = vshrl.u32 %v2572, 7
        %v2574 = vsub.s32 %v1722, %v2573
        %v2575 = vrot.slane %v1420, %v2574
        %v2576 = vsel %vm1727, %v2575, %v2571
        %v2577 = vlaneseq
        %v2578 = vshrl.u32 %v2577, 7
        %v2579 = vsub.s32 %v1729, %v2578
        %v2580 = vrot.slane %v1423, %v2579
        %v2581 = vsel %vm1734, %v2580, %v2576
        %v2582 = vlaneseq
        %v2583 = vshrl.u32 %v2582, 7
        %v2584 = vsub.s32 %v1736, %v2583
        %v2585 = vrot.slane %v1426, %v2584
        %v2586 = vsel %vm1741, %v2585, %v2581
        %v2587 = vlaneseq
        %v2588 = vshrl.u32 %v2587, 7
        %v2589 = vsub.s32 %v1743, %v2588
        %v2590 = vrot.slane %v1429, %v2589
        %v2591 = vsel %vm1748, %v2590, %v2586
        %v2592 = vlaneseq
        %v2593 = vshrl.u32 %v2592, 7
        %v2594 = vsub.s32 %v1750, %v2593
        %v2595 = vrot.slane %v1432, %v2594
        %v2596 = vsel %vm1755, %v2595, %v2591
        %v2597 = vlaneseq
        %v2598 = vshrl.u32 %v2597, 7
        %v2599 = vsub.s32 %v1757, %v2598
        %v2600 = vrot.slane %v1435, %v2599
        %v2601 = vsel %vm1762, %v2600, %v2596
        %v2602 = vlaneseq
        %v2603 = vshrl.u32 %v2602, 7
        %v2604 = vsub.s32 %v1764, %v2603
        %v2605 = vrot.slane %v1438, %v2604
        %v2606 = vsel %vm1769, %v2605, %v2601
        %v2607 = vlaneseq
        %v2608 = vshrl.u32 %v2607, 7
        %v2609 = vsub.s32 %v1771, %v2608
        %v2610 = vrot.slane %v1441, %v2609
        %v2611 = vsel %vm1776, %v2610, %v2606
        %v2612 = vlaneseq
        %v2613 = vshrl.u32 %v2612, 7
        %v2614 = vsub.s32 %v1778, %v2613
        %v2615 = vrot.slane %v1444, %v2614
        %v2616 = vsel %vm1783, %v2615, %v2611
        %v2617 = vlaneseq
        %v2618 = vshrl.u32 %v2617, 7
        %v2619 = vsub.s32 %v1785, %v2618
        %v2620 = vrot.slane %v1447, %v2619
        %v2621 = vsel %vm1790, %v2620, %v2616
        %v2622 = vlaneseq
        %v2623 = vshrl.u32 %v2622, 7
        %v2624 = vsub.s32 %v1792, %v2623
        %v2625 = vrot.slane %v1450, %v2624
        %v2626 = vsel %vm1797, %v2625, %v2621
        %v2627 = vlaneseq
        %v2628 = vshrl.u32 %v2627, 7
        %v2629 = vsub.s32 %v1799, %v2628
        %v2630 = vrot.slane %v1453, %v2629
        %v2631 = vsel %vm1804, %v2630, %v2626
        %v2632 = vlaneseq
        %v2633 = vshrl.u32 %v2632, 7
        %v2634 = vsub.s32 %v1696, %v2633
        %v2635 = vrot.slane %v1456, %v2634
        %v2636 = vlaneseq
        %v2637 = vshrl.u32 %v2636, 7
        %v2638 = vsub.s32 %v1701, %v2637
        %v2639 = vrot.slane %v1459, %v2638
        %v2640 = vsel %vm1706, %v2639, %v2635
        %v2641 = vlaneseq
        %v2642 = vshrl.u32 %v2641, 7
        %v2643 = vsub.s32 %v1708, %v2642
        %v2644 = vrot.slane %v1462, %v2643
        %v2645 = vsel %vm1713, %v2644, %v2640
        %v2646 = vlaneseq
        %v2647 = vshrl.u32 %v2646, 7
        %v2648 = vsub.s32 %v1715, %v2647
        %v2649 = vrot.slane %v1465, %v2648
        %v2650 = vsel %vm1720, %v2649, %v2645
        %v2651 = vlaneseq
        %v2652 = vshrl.u32 %v2651, 7
        %v2653 = vsub.s32 %v1722, %v2652
        %v2654 = vrot.slane %v1468, %v2653
        %v2655 = vsel %vm1727, %v2654, %v2650
        %v2656 = vlaneseq
        %v2657 = vshrl.u32 %v2656, 7
        %v2658 = vsub.s32 %v1729, %v2657
        %v2659 = vrot.slane %v1471, %v2658
        %v2660 = vsel %vm1734, %v2659, %v2655
        %v2661 = vlaneseq
        %v2662 = vshrl.u32 %v2661, 7
        %v2663 = vsub.s32 %v1736, %v2662
        %v2664 = vrot.slane %v1474, %v2663
        %v2665 = vsel %vm1741, %v2664, %v2660
        %v2666 = vlaneseq
        %v2667 = vshrl.u32 %v2666, 7
        %v2668 = vsub.s32 %v1743, %v2667
        %v2669 = vrot.slane %v1477, %v2668
        %v2670 = vsel %vm1748, %v2669, %v2665
        %vm2671 = vcmask 1041409
        %v2672 = vsel %vm2671, %v1923, %v1805
        %vm2673 = vcmask 1042434
        %v2674 = vsel %vm2673, %v2041, %v2672
        %vm2675 = vcmask 1043459
        %v2676 = vsel %vm2675, %v2159, %v2674
        %vm2677 = vcmask 1044484
        %v2678 = vsel %vm2677, %v2277, %v2676
        %vm2679 = vcmask 1045509
        %v2680 = vsel %vm2679, %v2395, %v2678
        %vm2681 = vcmask 1046534
        %v2682 = vsel %vm2681, %v2513, %v2680
        %vm2683 = vcmask 1047559
        %v2684 = vsel %vm2683, %v2631, %v2682
        %v2685 = vsel %vm2671, %v1962, %v1844
        %v2686 = vsel %vm2673, %v2080, %v2685
        %v2687 = vsel %vm2675, %v2198, %v2686
        %v2688 = vsel %vm2677, %v2316, %v2687
        %v2689 = vsel %vm2679, %v2434, %v2688
        %v2690 = vsel %vm2681, %v2552, %v2689
        %v2691 = vsel %vm2683, %v2670, %v2690
        %vm2693 = vcmask 523264
        %v2694 = vsel %vm2693, %v2691, 0
        %2696 = vmatprep.subr.mxu0 0.0
        %2697 = vmatpush1.msra.mxu0 %v1494
        %2698 = vmatprep.subr.mxu0 0.0
        %2699 = vmatpush1.msra.mxu0 %v1493
        %2700 = vmatprep.subr.mxu0 0.0
        %2701 = vmatpush1.msra.mxu0 %v1492
        %2702 = vmatprep.subr.mxu0 0.0
        %2703 = vmatpush1.msra.mxu0 %v1491
        %2704 = vmatprep.subr.mxu0 0.0
        %2705 = vmatpush1.msra.mxu0 %v1490
        %2706 = vmatprep.subr.mxu0 0.0
        %2707 = vmatpush1.msra.mxu0 %v1489
        %2708 = vmatprep.subr.mxu0 0.0
        %2709 = vmatpush1.msra.mxu0 %v1488
        %2710 = vmatprep.subr.mxu0 0.0
        %2711 = vmatpush1.msra.mxu0 %v1487
        %2712 = vmatprep.subr.mxu0 0.0
        %2713 = vmatpush1.msra.mxu0 %v1486
        %2714 = vmatprep.subr.mxu0 0.0
        %2715 = vmatpush1.msra.mxu0 %v1485
        %2716 = vmatprep.subr.mxu0 0.0
        %2717 = vmatpush1.msra.mxu0 %v1484
        %2718 = vmatprep.subr.mxu0 0.0
        %2719 = vmatpush1.msra.mxu0 %v1483
        %2720 = vmatprep.subr.mxu0 0.0
        %2721 = vmatpush1.msra.mxu0 %v1482
        %2722 = vmatprep.subr.mxu0 0.0
        %2723 = vmatpush1.msra.mxu0 %v1481
        %2724 = vmatprep.subr.mxu0 0.0
        %2725 = vmatpush1.msra.mxu0 %v1480
        %2726 = vmatprep.subr.mxu0 0.0
        %2727 = vmatpush1.msra.mxu0 %v1479
        %2728 = vmatprep.subr.mxu0 0.0
        %2729 = vmatpush2.msra.mxu0 0.0
        %2730 = vmatprep.subr.mxu0 0.0
        %2731 = vmatpush2.msra.mxu0 0.0
        %2732 = vmatprep.subr.mxu0 0.0
        %2733 = vmatpush2.msra.mxu0 0.0
        %2734 = vmatprep.subr.mxu0 0.0
        %2735 = vmatpush2.msra.mxu0 0.0
        %2736 = vmatprep.subr.mxu0 0.0
        %2737 = vmatpush2.msra.mxu0 0.0
        %2738 = vmatprep.subr.mxu0 0.0
        %2739 = vmatpush2.msra.mxu0 0.0
        %2740 = vmatprep.subr.mxu0 0.0
        %2741 = vmatpush2.msra.mxu0 0.0
        %2742 = vmatprep.subr.mxu0 0.0
        %2743 = vmatpush2.msra.mxu0 0.0
        %2744 = vmatprep.subr.mxu0 0.0
        %2745 = vmatpush2.msra.mxu0 %v1502
        %2746 = vmatprep.subr.mxu0 0.0
        %2747 = vmatpush2.msra.mxu0 %v1501
        %2748 = vmatprep.subr.mxu0 0.0
        %2749 = vmatpush2.msra.mxu0 %v1500
        %2750 = vmatprep.subr.mxu0 0.0
        %2751 = vmatpush2.msra.mxu0 %v1499
        %2752 = vmatprep.subr.mxu0 0.0
        %2753 = vmatpush2.msra.mxu0 %v1498
        %2754 = vmatprep.subr.mxu0 0.0
        %2755 = vmatpush2.msra.mxu0 %v1497
        %2756 = vmatprep.subr.mxu0 0.0
        %2757 = vmatpush2.msra.mxu0 %v1496
        %2758 = vmatprep.subr.mxu0 0.0
        %2759 = vmatpush2.msra.mxu0 %v1495
        %2760 = vmatprep.mubr.f32.mxu0 %v2694
        %2761 = vmatmul.mubr.f32.gmra.mxu0 %v2684
        %v2762 = vpop.f32.mrf.mxu0
        %v2763 = vadd.f32 0.0, %v2762
        %v2764 = vpop.f32.mrf.mxu0
        %2765 = vdwg.mxu0
        %v2766 = vadd.f32 %v1478, %v2763
        %2767 = vst [vmem:[#allocation2] sm:$0xff] %v2766
        %p2768 = scmp.eq.s32.totalorder %s22, 1
        // Predicated region
        $region89: #{_lambda_.1} parent=79 // pred_check
          %p2769 = pneg %p2768
        $region90: #{_lambda_.1} parent=79 // pred_check_branch
          %2771 = sbr.rel (%p2769) target = $region92
        $region91: #{_lambda_.1} parent=79 // pred_region
          %v2772 = vld [vmem:[#allocation2] sm:$0xff]
          %v2773 = vld [vmem:[%s2] sm:$0x1]
          %v2775 = vlaneseq
          %v2776 = vshrl.u32 %v2775, 7
          %v2777 = vsub.s32 0, %v2776
          %v2778 = vrot.slane %v2773, %v2777
          %v2780 = vadd.f32 %v2772, %v2778
          %2781 = vst [vmem:[%s690] sm:$0xff] %v2780
        $region92: #{_lambda_.1} parent=79 // pred_fallthru
          _
        %s2782 = sand.u32 %s112, 1
        %s2783 = scalar_lea.sflag [#allocation5], %s2782
        %s2784 = sand.u32 %s112, 1
        %s2785 = smul.addr %s2784, 8
        %s2786 = scalar_lea.vmem [#allocation4], %s2785
        // Predicated region
        $region93: #{_lambda_.1} parent=79 // pred_check
          %p2787 = pneg %p122
        $region94: #{_lambda_.1} parent=79 // pred_check_branch
          %2789 = sbr.rel (%p2787) target = $region96
        $region95: #{_lambda_.1} parent=79 // pred_region
          %s2791 = ssub.s32 128, 128
          %2792 = vsyncadd %s2783, %s2791
          %s2793 = smul.addr %s21, 128
          %s2794 = scalar_lea.hbm %s3, %s2793
          %s2796 = sshll.u32 %s2786, 4
          %s2797 = int_to_ptr.vmem [resolvable:$true] %s2796
          %2799 = dma.vmem_to_hbm [thread:$0]  %s2797, 128, %s2794, %s2783
        $region96: #{_lambda_.1} parent=79 // pred_fallthru
          _
      $region80: #{_lambda_.1} parent=5 // pred_fallthru
        _
      %p2800 = scmp.le.s32.totalorder 2, %s12
      // Predicated region
      $region97: #{_lambda_.1} parent=5 // pred_check
        %p2801 = pneg %p2800
      $region98: #{_lambda_.1} parent=5 // pred_check_branch
        %2803 = sbr.rel (%p2801) target = $region100
      $region99: #{_lambda_.1} parent=5 // pred_region
        %s2804 = ssub.s32 %s12, 2
        // Predicated region
        $region101: #{_lambda_.1} parent=99 // pred_check
          %p2805 = pneg %p128
        $region102: #{_lambda_.1} parent=99 // pred_check_branch
          %2807 = sbr.rel (%p2805) target = $region104
        $region103: #{_lambda_.1} parent=99 // pred_region
          %s2808 = sand.u32 %s113, 1
          %s2809 = scalar_lea.sflag [#allocation5], %s2808
          %s2810 = sand.u32 %s113, 1
          %s2811 = smul.addr %s2810, 8
          %s2812 = scalar_lea.vmem [#allocation4], %s2811
          %2813 = dma.done %s2809, 128
        $region104: #{_lambda_.1} parent=99 // pred_fallthru
          _
      $region100: #{_lambda_.1} parent=5 // pred_fallthru
        _
    $region6: #{_lambda_.1} parent=1 // loop_footer
      %s16 = sadd.s32 1, %s12
    $region7: #{_lambda_.1} parent=1 // loop_footer_branch
      %11 = sbr.rel target = $region3
    $region8: #{_lambda_.1} parent=1 // loop_exit
      _
    %2814 = vsyncpa [#allocation5], 1
    %s2815 = scalar_lea.sflag [#allocation5], 1
    %2816 = vsyncpa %s2815, 1

</llo_original>
